<compile_context>
chip_gen: v5e
topology: v5e:2x2
jax: 0.10.0
libtpu: 0.0.40
codegen_flags: <defaults>
</compile_context>

<pallas_src>
import functools

import jax
import jax.numpy as jnp
import numpy as np
from jax.experimental import pallas as pl
from jax.experimental.pallas import tpu as pltpu


def resblock_kernel(x_ref, w1_ref, b1_ref, w2_ref, b2_ref, m_ref, o_ref,
                    patches_ref, *, img_w):
    """Fused ResidualBlock forward for one batch tile.

    x_ref:         (BT, C, H*W) f32  activations, spatial flattened onto lanes
    w1_ref/w2_ref: (C, 9*C)     f32  conv weights, columns ordered (tap, cin)
    b1_ref/b2_ref: (C, 1)       f32  biases
    m_ref:         (9, 1, H*W)  f32  0/1 padding masks, one per 3x3 tap
    o_ref:         (BT, C, H*W) f32  output
    patches_ref:   (9*C, H*W)   f32  VMEM scratch holding the im2col matrix
    """
    bt, c, _ = x_ref.shape
    n_taps = m_ref.shape[0]

    # Flat lane shift for tap (ki, kj) of a 3x3 kernel with padding=1, row-major over
    # (h, w): d = (ki-1)*W + (kj-1).  Same tap order as the masks and as the (tap, cin)
    # column order of the pre-flattened weights.
    shifts = [(ki - 1) * img_w + (kj - 1) for ki in range(3) for kj in range(3)]

    # Hoist all grid-invariant loads out of the batch / conv loops.
    w1 = w1_ref[...]
    w2 = w2_ref[...]
    b1 = b1_ref[...]
    b2 = b2_ref[...]
    masks = [m_ref[t] for t in range(n_taps)]              # each (1, H*W)

    def conv3x3(z, w):
        # im2col: stage the 9 shifted + zero-masked copies of z into the (9C, H*W)
        # scratch (sublane-offset stores), then do ONE MXU matmul against the
        # pre-flattened weight.  Rolls hit the XLU, mask muls the VPU.
        for t, (d, m) in enumerate(zip(shifts, masks)):
            s = z if d == 0 else jnp.roll(z, -d, axis=1)   # s[:, n] = z[:, n + d]
            patches_ref[t * c:(t + 1) * c, :] = s * m      # mask == the zero padding
        return jnp.dot(w, patches_ref[...],                # (C, 9C) @ (9C, H*W)
                       preferred_element_type=jnp.float32)

    for b in range(bt):                                    # whole batch in one grid step
        xb = x_ref[b]                                      # (C, H*W) residual stream
        y1 = jnp.maximum(conv3x3(xb, w1) + b1, 0.0)        # conv1 + bias + ReLU
        y2 = conv3x3(y1, w2) + b2                          # conv2 + bias
        o_ref[b] = jnp.maximum(y2 + xb, 0.0).astype(o_ref.dtype)


def _tap_masks(h, w):
    """(9, 1, h*w) f32 0/1 masks implementing the zero padding of a 3x3 'same' conv."""
    hh = np.arange(h)[:, None]
    ww = np.arange(w)[None, :]
    masks = []
    for ki in range(3):
        for kj in range(3):
            src_h = hh + ki - 1
            src_w = ww + kj - 1
            valid = (src_h >= 0) & (src_h < h) & (src_w >= 0) & (src_w < w)
            masks.append(valid.astype(np.float32).reshape(1, h * w))
    return jnp.asarray(np.stack(masks, axis=0))


@jax.jit
def residual_block_forward(x_nchw, w1_oihw, b1, w2_oihw, b2):
    """x_nchw: (B, C, H, W) f32; weights (C, C, 3, 3) OIHW; biases (C,)."""
    B, C, H, W = x_nchw.shape
    N = H * W

    # Only free, contiguous reshapes in the wrapper: the kernel consumes (B, C, H*W)
    # directly, keeping the 256-wide spatial axis on lanes (multiple of 128).
    xf = x_nchw.reshape(B, C, N).astype(jnp.float32)

    # OIHW -> (O, kh, kw, I) -> (C, 9C): columns ordered (tap, cin), matching the
    # im2col row order built in the kernel.  Weight-only transform, tiny.
    w1t = jnp.transpose(w1_oihw, (0, 2, 3, 1)).reshape(C, 9 * C).astype(jnp.float32)
    w2t = jnp.transpose(w2_oihw, (0, 2, 3, 1)).reshape(C, 9 * C).astype(jnp.float32)
    b1c = b1.reshape(C, 1).astype(jnp.float32)
    b2c = b2.reshape(C, 1).astype(jnp.float32)
    masks = _tap_masks(H, W)

    kernel = functools.partial(resblock_kernel, img_w=W)

    out_flat = pl.pallas_call(
        kernel,
        out_shape=jax.ShapeDtypeStruct((B, C, N), jnp.float32),
        grid=(1,),                                            # batch folded: one step
        in_specs=[
            pl.BlockSpec((B, C, N), lambda i: (0, 0, 0)),     # activations
            pl.BlockSpec((C, 9 * C), lambda i: (0, 0)),       # w1 (grid-invariant)
            pl.BlockSpec((C, 1), lambda i: (0, 0)),           # b1
            pl.BlockSpec((C, 9 * C), lambda i: (0, 0)),       # w2
            pl.BlockSpec((C, 1), lambda i: (0, 0)),           # b2
            pl.BlockSpec((9, 1, N), lambda i: (0, 0, 0)),     # 3x3 padding masks
        ],
        out_specs=pl.BlockSpec((B, C, N), lambda i: (0, 0, 0)),
        scratch_shapes=[pltpu.VMEM((9 * C, N), jnp.float32)], # im2col matrix
        compiler_params=pltpu.CompilerParams(
            dimension_semantics=("parallel",)),
    )(xf, w1t, b1c, w2t, b2c, masks)

    return out_flat.reshape(B, C, H, W)


def _reference(x, w1, b1, w2, b2):
    """Pure-JAX reference matching torch semantics (NCHW, OIHW), full f32 precision."""
    dn = jax.lax.conv_dimension_numbers(x.shape, w1.shape, ('NCHW', 'OIHW', 'NCHW'))
    y = jax.lax.conv_general_dilated(x, w1, (1, 1), 'SAME', dimension_numbers=dn,
                                     precision=jax.lax.Precision.HIGHEST)
    y = jax.nn.relu(y + b1.reshape(1, -1, 1, 1))
    y = jax.lax.conv_general_dilated(y, w2, (1, 1), 'SAME', dimension_numbers=dn,
                                     precision=jax.lax.Precision.HIGHEST)
    return jax.nn.relu(y + b2.reshape(1, -1, 1, 1) + x)


if __name__ == "__main__":
    B, C, H, W = 2, 4, 16, 16
    key = jax.random.PRNGKey(0)
    kx, k1, kb1, k2, kb2 = jax.random.split(key, 5)

    x = jax.random.normal(kx, (B, C, H, W), jnp.float32)

    # Deterministic init mirroring Conv2d's uniform(-1/sqrt(fan_in), 1/sqrt(fan_in)).
    fan_in = C * 3 * 3
    bound = 1.0 / (fan_in ** 0.5)
    w1 = jax.random.uniform(k1, (C, C, 3, 3), jnp.float32, -bound, bound)
    b1 = jax.random.uniform(kb1, (C,), jnp.float32, -bound, bound)
    w2 = jax.random.uniform(k2, (C, C, 3, 3), jnp.float32, -bound, bound)
    b2 = jax.random.uniform(kb2, (C,), jnp.float32, -bound, bound)

    out = jax.block_until_ready(residual_block_forward(x, w1, b1, w2, b2))
    ref = jax.block_until_ready(_reference(x, w1, b1, w2, b2))

    assert out.shape == (B, C, H, W), out.shape
    # Tolerance covers the default Mosaic f32 MXU path vs. the HIGHEST-precision
    # reference; any structural bug (wrong tap/mask/weight order) is O(0.1..1).
    max_err = float(jnp.max(jnp.abs(out - ref)))
    assert max_err < 1e-3, f"max abs err {max_err}"
    print("KERNEL_OK")
</pallas_src>

<mosaic_0001>
module attributes {stable_mosaic.version = 11 : i64} {
  func.func @resblock_kernel(%arg0: i32, %arg1: memref<2x4x256xf32, #tpu.memory_space<vmem>>, %arg2: memref<4x36xf32, #tpu.memory_space<vmem>>, %arg3: memref<4x1xf32, #tpu.memory_space<vmem>>, %arg4: memref<4x36xf32, #tpu.memory_space<vmem>>, %arg5: memref<4x1xf32, #tpu.memory_space<vmem>>, %arg6: memref<9x1x256xf32, #tpu.memory_space<vmem>>, %arg7: memref<2x4x256xf32, #tpu.memory_space<vmem>>, %arg8: memref<36x256xf32, #tpu.memory_space<vmem>>) attributes {dimension_semantics = [#tpu.dimension_semantics<parallel>], iteration_bounds = array<i64: 1>, scalar_prefetch = 0 : i64, scratch_operands = 1 : i64, tpu.core_type = #tpu.core_type<tc>, window_params = [{pipeline_mode = #tpu.pipeline_mode<synchronous>, transform_indices = @transform_0, window_bounds = array<i64: 2, 4, 256>}, {pipeline_mode = #tpu.pipeline_mode<synchronous>, transform_indices = @transform_1, window_bounds = array<i64: 4, 36>}, {pipeline_mode = #tpu.pipeline_mode<synchronous>, transform_indices = @transform_2, window_bounds = array<i64: 4, 1>}, {pipeline_mode = #tpu.pipeline_mode<synchronous>, transform_indices = @transform_3, window_bounds = array<i64: 4, 36>}, {pipeline_mode = #tpu.pipeline_mode<synchronous>, transform_indices = @transform_4, window_bounds = array<i64: 4, 1>}, {pipeline_mode = #tpu.pipeline_mode<synchronous>, transform_indices = @transform_5, window_bounds = array<i64: 9, 1, 256>}, {pipeline_mode = #tpu.pipeline_mode<synchronous>, transform_indices = @transform_6, window_bounds = array<i64: 2, 4, 256>}]} {
    %c0 = arith.constant 0 : index
    %c0_0 = arith.constant 0 : index
    %0 = vector.load %arg2[%c0, %c0_0] : memref<4x36xf32, #tpu.memory_space<vmem>>, vector<4x36xf32>
    %c0_1 = arith.constant 0 : index
    %c0_2 = arith.constant 0 : index
    %1 = vector.load %arg4[%c0_1, %c0_2] : memref<4x36xf32, #tpu.memory_space<vmem>>, vector<4x36xf32>
    %c0_3 = arith.constant 0 : index
    %c0_4 = arith.constant 0 : index
    %2 = vector.load %arg3[%c0_3, %c0_4] : memref<4x1xf32, #tpu.memory_space<vmem>>, vector<4x1xf32>
    %c0_5 = arith.constant 0 : index
    %c0_6 = arith.constant 0 : index
    %3 = vector.load %arg5[%c0_5, %c0_6] : memref<4x1xf32, #tpu.memory_space<vmem>>, vector<4x1xf32>
    %c0_7 = arith.constant 0 : index
    %c0_8 = arith.constant 0 : index
    %c0_9 = arith.constant 0 : index
    %4 = vector.load %arg6[%c0_7, %c0_8, %c0_9] : memref<9x1x256xf32, #tpu.memory_space<vmem>>, vector<1x1x256xf32>
    %5 = vector.shape_cast %4 : vector<1x1x256xf32> to vector<1x256xf32>
    %c1 = arith.constant 1 : index
    %c0_10 = arith.constant 0 : index
    %c0_11 = arith.constant 0 : index
    %6 = vector.load %arg6[%c1, %c0_10, %c0_11] : memref<9x1x256xf32, #tpu.memory_space<vmem>>, vector<1x1x256xf32>
    %7 = vector.shape_cast %6 : vector<1x1x256xf32> to vector<1x256xf32>
    %c2 = arith.constant 2 : index
    %c0_12 = arith.constant 0 : index
    %c0_13 = arith.constant 0 : index
    %8 = vector.load %arg6[%c2, %c0_12, %c0_13] : memref<9x1x256xf32, #tpu.memory_space<vmem>>, vector<1x1x256xf32>
    %9 = vector.shape_cast %8 : vector<1x1x256xf32> to vector<1x256xf32>
    %c3 = arith.constant 3 : index
    %c0_14 = arith.constant 0 : index
    %c0_15 = arith.constant 0 : index
    %10 = vector.load %arg6[%c3, %c0_14, %c0_15] : memref<9x1x256xf32, #tpu.memory_space<vmem>>, vector<1x1x256xf32>
    %11 = vector.shape_cast %10 : vector<1x1x256xf32> to vector<1x256xf32>
    %c4 = arith.constant 4 : index
    %c0_16 = arith.constant 0 : index
    %c0_17 = arith.constant 0 : index
    %12 = vector.load %arg6[%c4, %c0_16, %c0_17] : memref<9x1x256xf32, #tpu.memory_space<vmem>>, vector<1x1x256xf32>
    %13 = vector.shape_cast %12 : vector<1x1x256xf32> to vector<1x256xf32>
    %c5 = arith.constant 5 : index
    %c0_18 = arith.constant 0 : index
    %c0_19 = arith.constant 0 : index
    %14 = vector.load %arg6[%c5, %c0_18, %c0_19] : memref<9x1x256xf32, #tpu.memory_space<vmem>>, vector<1x1x256xf32>
    %15 = vector.shape_cast %14 : vector<1x1x256xf32> to vector<1x256xf32>
    %c6 = arith.constant 6 : index
    %c0_20 = arith.constant 0 : index
    %c0_21 = arith.constant 0 : index
    %16 = vector.load %arg6[%c6, %c0_20, %c0_21] : memref<9x1x256xf32, #tpu.memory_space<vmem>>, vector<1x1x256xf32>
    %17 = vector.shape_cast %16 : vector<1x1x256xf32> to vector<1x256xf32>
    %c7 = arith.constant 7 : index
    %c0_22 = arith.constant 0 : index
    %c0_23 = arith.constant 0 : index
    %18 = vector.load %arg6[%c7, %c0_22, %c0_23] : memref<9x1x256xf32, #tpu.memory_space<vmem>>, vector<1x1x256xf32>
    %19 = vector.shape_cast %18 : vector<1x1x256xf32> to vector<1x256xf32>
    %c8 = arith.constant 8 : index
    %c0_24 = arith.constant 0 : index
    %c0_25 = arith.constant 0 : index
    %20 = vector.load %arg6[%c8, %c0_24, %c0_25] : memref<9x1x256xf32, #tpu.memory_space<vmem>>, vector<1x1x256xf32>
    %21 = vector.shape_cast %20 : vector<1x1x256xf32> to vector<1x256xf32>
    %c0_26 = arith.constant 0 : index
    %c0_27 = arith.constant 0 : index
    %c0_28 = arith.constant 0 : index
    %22 = vector.load %arg1[%c0_26, %c0_27, %c0_28] : memref<2x4x256xf32, #tpu.memory_space<vmem>>, vector<1x4x256xf32>
    %23 = vector.shape_cast %22 : vector<1x4x256xf32> to vector<4x256xf32>
    %24 = vector.extract_strided_slice %23 {offsets = [0, 239], sizes = [4, 17], strides = [1, 1]} : vector<4x256xf32> to vector<4x17xf32>
    %25 = vector.extract_strided_slice %23 {offsets = [0, 0], sizes = [4, 239], strides = [1, 1]} : vector<4x256xf32> to vector<4x239xf32>
    %26 = tpu.concatenate %24, %25 in 1 : vector<4x17xf32>, vector<4x239xf32> -> vector<4x256xf32>
    %27 = vector.broadcast %5 : vector<1x256xf32> to vector<4x256xf32>
    %28 = arith.mulf %26, %27 : vector<4x256xf32>
    %c0_29 = arith.constant 0 : index
    %c0_30 = arith.constant 0 : index
    %29 = vector.load %arg8[%c0_29, %c0_30] : memref<36x256xf32, #tpu.memory_space<vmem>>, vector<4x256xf32>
    tpu.vector_store %arg8[%c0_29, %c0_30], %28 {strides = array<i32>} : memref<36x256xf32, #tpu.memory_space<vmem>>, vector<4x256xf32>,
    %30 = vector.extract_strided_slice %23 {offsets = [0, 240], sizes = [4, 16], strides = [1, 1]} : vector<4x256xf32> to vector<4x16xf32>
    %31 = vector.extract_strided_slice %23 {offsets = [0, 0], sizes = [4, 240], strides = [1, 1]} : vector<4x256xf32> to vector<4x240xf32>
    %32 = tpu.concatenate %30, %31 in 1 : vector<4x16xf32>, vector<4x240xf32> -> vector<4x256xf32>
    %33 = vector.broadcast %7 : vector<1x256xf32> to vector<4x256xf32>
    %34 = arith.mulf %32, %33 : vector<4x256xf32>
    %c4_31 = arith.constant 4 : index
    %c0_32 = arith.constant 0 : index
    %35 = vector.load %arg8[%c4_31, %c0_32] : memref<36x256xf32, #tpu.memory_space<vmem>>, vector<4x256xf32>
    tpu.vector_store %arg8[%c4_31, %c0_32], %34 {strides = array<i32>} : memref<36x256xf32, #tpu.memory_space<vmem>>, vector<4x256xf32>,
    %36 = vector.extract_strided_slice %23 {offsets = [0, 241], sizes = [4, 15], strides = [1, 1]} : vector<4x256xf32> to vector<4x15xf32>
    %37 = vector.extract_strided_slice %23 {offsets = [0, 0], sizes = [4, 241], strides = [1, 1]} : vector<4x256xf32> to vector<4x241xf32>
    %38 = tpu.concatenate %36, %37 in 1 : vector<4x15xf32>, vector<4x241xf32> -> vector<4x256xf32>
    %39 = vector.broadcast %9 : vector<1x256xf32> to vector<4x256xf32>
    %40 = arith.mulf %38, %39 : vector<4x256xf32>
    %c8_33 = arith.constant 8 : index
    %c0_34 = arith.constant 0 : index
    %41 = vector.load %arg8[%c8_33, %c0_34] : memref<36x256xf32, #tpu.memory_space<vmem>>, vector<4x256xf32>
    tpu.vector_store %arg8[%c8_33, %c0_34], %40 {strides = array<i32>} : memref<36x256xf32, #tpu.memory_space<vmem>>, vector<4x256xf32>,
    %42 = vector.extract_strided_slice %23 {offsets = [0, 255], sizes = [4, 1], strides = [1, 1]} : vector<4x256xf32> to vector<4x1xf32>
    %43 = vector.extract_strided_slice %23 {offsets = [0, 0], sizes = [4, 255], strides = [1, 1]} : vector<4x256xf32> to vector<4x255xf32>
    %44 = tpu.concatenate %42, %43 in 1 : vector<4x1xf32>, vector<4x255xf32> -> vector<4x256xf32>
    %45 = vector.broadcast %11 : vector<1x256xf32> to vector<4x256xf32>
    %46 = arith.mulf %44, %45 : vector<4x256xf32>
    %c12 = arith.constant 12 : index
    %c0_35 = arith.constant 0 : index
    %47 = vector.load %arg8[%c12, %c0_35] : memref<36x256xf32, #tpu.memory_space<vmem>>, vector<4x256xf32>
    tpu.vector_store %arg8[%c12, %c0_35], %46 {strides = array<i32>} : memref<36x256xf32, #tpu.memory_space<vmem>>, vector<4x256xf32>,
    %48 = vector.broadcast %13 : vector<1x256xf32> to vector<4x256xf32>
    %49 = arith.mulf %23, %48 : vector<4x256xf32>
    %c16 = arith.constant 16 : index
    %c0_36 = arith.constant 0 : index
    %50 = vector.load %arg8[%c16, %c0_36] : memref<36x256xf32, #tpu.memory_space<vmem>>, vector<4x256xf32>
    tpu.vector_store %arg8[%c16, %c0_36], %49 {strides = array<i32>} : memref<36x256xf32, #tpu.memory_space<vmem>>, vector<4x256xf32>,
    %51 = vector.extract_strided_slice %23 {offsets = [0, 1], sizes = [4, 255], strides = [1, 1]} : vector<4x256xf32> to vector<4x255xf32>
    %52 = vector.extract_strided_slice %23 {offsets = [0, 0], sizes = [4, 1], strides = [1, 1]} : vector<4x256xf32> to vector<4x1xf32>
    %53 = tpu.concatenate %51, %52 in 1 : vector<4x255xf32>, vector<4x1xf32> -> vector<4x256xf32>
    %54 = vector.broadcast %15 : vector<1x256xf32> to vector<4x256xf32>
    %55 = arith.mulf %53, %54 : vector<4x256xf32>
    %c20 = arith.constant 20 : index
    %c0_37 = arith.constant 0 : index
    %56 = vector.load %arg8[%c20, %c0_37] : memref<36x256xf32, #tpu.memory_space<vmem>>, vector<4x256xf32>
    tpu.vector_store %arg8[%c20, %c0_37], %55 {strides = array<i32>} : memref<36x256xf32, #tpu.memory_space<vmem>>, vector<4x256xf32>,
    %57 = vector.extract_strided_slice %23 {offsets = [0, 15], sizes = [4, 241], strides = [1, 1]} : vector<4x256xf32> to vector<4x241xf32>
    %58 = vector.extract_strided_slice %23 {offsets = [0, 0], sizes = [4, 15], strides = [1, 1]} : vector<4x256xf32> to vector<4x15xf32>
    %59 = tpu.concatenate %57, %58 in 1 : vector<4x241xf32>, vector<4x15xf32> -> vector<4x256xf32>
    %60 = vector.broadcast %17 : vector<1x256xf32> to vector<4x256xf32>
    %61 = arith.mulf %59, %60 : vector<4x256xf32>
    %c24 = arith.constant 24 : index
    %c0_38 = arith.constant 0 : index
    %62 = vector.load %arg8[%c24, %c0_38] : memref<36x256xf32, #tpu.memory_space<vmem>>, vector<4x256xf32>
    tpu.vector_store %arg8[%c24, %c0_38], %61 {strides = array<i32>} : memref<36x256xf32, #tpu.memory_space<vmem>>, vector<4x256xf32>,
    %63 = vector.extract_strided_slice %23 {offsets = [0, 16], sizes = [4, 240], strides = [1, 1]} : vector<4x256xf32> to vector<4x240xf32>
    %64 = vector.extract_strided_slice %23 {offsets = [0, 0], sizes = [4, 16], strides = [1, 1]} : vector<4x256xf32> to vector<4x16xf32>
    %65 = tpu.concatenate %63, %64 in 1 : vector<4x240xf32>, vector<4x16xf32> -> vector<4x256xf32>
    %66 = vector.broadcast %19 : vector<1x256xf32> to vector<4x256xf32>
    %67 = arith.mulf %65, %66 : vector<4x256xf32>
    %c28 = arith.constant 28 : index
    %c0_39 = arith.constant 0 : index
    %68 = vector.load %arg8[%c28, %c0_39] : memref<36x256xf32, #tpu.memory_space<vmem>>, vector<4x256xf32>
    tpu.vector_store %arg8[%c28, %c0_39], %67 {strides = array<i32>} : memref<36x256xf32, #tpu.memory_space<vmem>>, vector<4x256xf32>,
    %69 = vector.extract_strided_slice %23 {offsets = [0, 17], sizes = [4, 239], strides = [1, 1]} : vector<4x256xf32> to vector<4x239xf32>
    %70 = vector.extract_strided_slice %23 {offsets = [0, 0], sizes = [4, 17], strides = [1, 1]} : vector<4x256xf32> to vector<4x17xf32>
    %71 = tpu.concatenate %69, %70 in 1 : vector<4x239xf32>, vector<4x17xf32> -> vector<4x256xf32>
    %72 = vector.broadcast %21 : vector<1x256xf32> to vector<4x256xf32>
    %73 = arith.mulf %71, %72 : vector<4x256xf32>
    %c32 = arith.constant 32 : index
    %c0_40 = arith.constant 0 : index
    %74 = vector.load %arg8[%c32, %c0_40] : memref<36x256xf32, #tpu.memory_space<vmem>>, vector<4x256xf32>
    tpu.vector_store %arg8[%c32, %c0_40], %73 {strides = array<i32>} : memref<36x256xf32, #tpu.memory_space<vmem>>, vector<4x256xf32>,
    %c0_41 = arith.constant 0 : index
    %c0_42 = arith.constant 0 : index
    %75 = vector.load %arg8[%c0_41, %c0_42] : memref<36x256xf32, #tpu.memory_space<vmem>>, vector<36x256xf32>
    %cst = arith.constant dense<0.000000e+00> : vector<4x256xf32>
    %76 = tpu.matmul %0, %75, %cst {dimension_numbers = #tpu.dot_dimension_numbers<[1], [0], [0], [1], [0, 0, 1, 1], [], []>} : vector<4x36xf32>, vector<36x256xf32>, vector<4x256xf32> -> vector<4x256xf32>
    %77 = vector.broadcast %2 : vector<4x1xf32> to vector<4x256xf32>
    %78 = arith.addf %76, %77 : vector<4x256xf32>
    %cst_43 = arith.constant 0.000000e+00 : f32
    %79 = vector.broadcast %cst_43 : f32 to vector<4x256xf32>
    %80 = arith.maximumf %78, %79 : vector<4x256xf32>
    %81 = vector.extract_strided_slice %80 {offsets = [0, 239], sizes = [4, 17], strides = [1, 1]} : vector<4x256xf32> to vector<4x17xf32>
    %82 = vector.extract_strided_slice %80 {offsets = [0, 0], sizes = [4, 239], strides = [1, 1]} : vector<4x256xf32> to vector<4x239xf32>
    %83 = tpu.concatenate %81, %82 in 1 : vector<4x17xf32>, vector<4x239xf32> -> vector<4x256xf32>
    %84 = vector.broadcast %5 : vector<1x256xf32> to vector<4x256xf32>
    %85 = arith.mulf %83, %84 : vector<4x256xf32>
    %c0_44 = arith.constant 0 : index
    %c0_45 = arith.constant 0 : index
    %86 = vector.load %arg8[%c0_44, %c0_45] : memref<36x256xf32, #tpu.memory_space<vmem>>, vector<4x256xf32>
    tpu.vector_store %arg8[%c0_44, %c0_45], %85 {strides = array<i32>} : memref<36x256xf32, #tpu.memory_space<vmem>>, vector<4x256xf32>,
    %87 = vector.extract_strided_slice %80 {offsets = [0, 240], sizes = [4, 16], strides = [1, 1]} : vector<4x256xf32> to vector<4x16xf32>
    %88 = vector.extract_strided_slice %80 {offsets = [0, 0], sizes = [4, 240], strides = [1, 1]} : vector<4x256xf32> to vector<4x240xf32>
    %89 = tpu.concatenate %87, %88 in 1 : vector<4x16xf32>, vector<4x240xf32> -> vector<4x256xf32>
    %90 = vector.broadcast %7 : vector<1x256xf32> to vector<4x256xf32>
    %91 = arith.mulf %89, %90 : vector<4x256xf32>
    %c4_46 = arith.constant 4 : index
    %c0_47 = arith.constant 0 : index
    %92 = vector.load %arg8[%c4_46, %c0_47] : memref<36x256xf32, #tpu.memory_space<vmem>>, vector<4x256xf32>
    tpu.vector_store %arg8[%c4_46, %c0_47], %91 {strides = array<i32>} : memref<36x256xf32, #tpu.memory_space<vmem>>, vector<4x256xf32>,
    %93 = vector.extract_strided_slice %80 {offsets = [0, 241], sizes = [4, 15], strides = [1, 1]} : vector<4x256xf32> to vector<4x15xf32>
    %94 = vector.extract_strided_slice %80 {offsets = [0, 0], sizes = [4, 241], strides = [1, 1]} : vector<4x256xf32> to vector<4x241xf32>
    %95 = tpu.concatenate %93, %94 in 1 : vector<4x15xf32>, vector<4x241xf32> -> vector<4x256xf32>
    %96 = vector.broadcast %9 : vector<1x256xf32> to vector<4x256xf32>
    %97 = arith.mulf %95, %96 : vector<4x256xf32>
    %c8_48 = arith.constant 8 : index
    %c0_49 = arith.constant 0 : index
    %98 = vector.load %arg8[%c8_48, %c0_49] : memref<36x256xf32, #tpu.memory_space<vmem>>, vector<4x256xf32>
    tpu.vector_store %arg8[%c8_48, %c0_49], %97 {strides = array<i32>} : memref<36x256xf32, #tpu.memory_space<vmem>>, vector<4x256xf32>,
    %99 = vector.extract_strided_slice %80 {offsets = [0, 255], sizes = [4, 1], strides = [1, 1]} : vector<4x256xf32> to vector<4x1xf32>
    %100 = vector.extract_strided_slice %80 {offsets = [0, 0], sizes = [4, 255], strides = [1, 1]} : vector<4x256xf32> to vector<4x255xf32>
    %101 = tpu.concatenate %99, %100 in 1 : vector<4x1xf32>, vector<4x255xf32> -> vector<4x256xf32>
    %102 = vector.broadcast %11 : vector<1x256xf32> to vector<4x256xf32>
    %103 = arith.mulf %101, %102 : vector<4x256xf32>
    %c12_50 = arith.constant 12 : index
    %c0_51 = arith.constant 0 : index
    %104 = vector.load %arg8[%c12_50, %c0_51] : memref<36x256xf32, #tpu.memory_space<vmem>>, vector<4x256xf32>
    tpu.vector_store %arg8[%c12_50, %c0_51], %103 {strides = array<i32>} : memref<36x256xf32, #tpu.memory_space<vmem>>, vector<4x256xf32>,
    %105 = vector.broadcast %13 : vector<1x256xf32> to vector<4x256xf32>
    %106 = arith.mulf %80, %105 : vector<4x256xf32>
    %c16_52 = arith.constant 16 : index
    %c0_53 = arith.constant 0 : index
    %107 = vector.load %arg8[%c16_52, %c0_53] : memref<36x256xf32, #tpu.memory_space<vmem>>, vector<4x256xf32>
    tpu.vector_store %arg8[%c16_52, %c0_53], %106 {strides = array<i32>} : memref<36x256xf32, #tpu.memory_space<vmem>>, vector<4x256xf32>,
    %108 = vector.extract_strided_slice %80 {offsets = [0, 1], sizes = [4, 255], strides = [1, 1]} : vector<4x256xf32> to vector<4x255xf32>
    %109 = vector.extract_strided_slice %80 {offsets = [0, 0], sizes = [4, 1], strides = [1, 1]} : vector<4x256xf32> to vector<4x1xf32>
    %110 = tpu.concatenate %108, %109 in 1 : vector<4x255xf32>, vector<4x1xf32> -> vector<4x256xf32>
    %111 = vector.broadcast %15 : vector<1x256xf32> to vector<4x256xf32>
    %112 = arith.mulf %110, %111 : vector<4x256xf32>
    %c20_54 = arith.constant 20 : index
    %c0_55 = arith.constant 0 : index
    %113 = vector.load %arg8[%c20_54, %c0_55] : memref<36x256xf32, #tpu.memory_space<vmem>>, vector<4x256xf32>
    tpu.vector_store %arg8[%c20_54, %c0_55], %112 {strides = array<i32>} : memref<36x256xf32, #tpu.memory_space<vmem>>, vector<4x256xf32>,
    %114 = vector.extract_strided_slice %80 {offsets = [0, 15], sizes = [4, 241], strides = [1, 1]} : vector<4x256xf32> to vector<4x241xf32>
    %115 = vector.extract_strided_slice %80 {offsets = [0, 0], sizes = [4, 15], strides = [1, 1]} : vector<4x256xf32> to vector<4x15xf32>
    %116 = tpu.concatenate %114, %115 in 1 : vector<4x241xf32>, vector<4x15xf32> -> vector<4x256xf32>
    %117 = vector.broadcast %17 : vector<1x256xf32> to vector<4x256xf32>
    %118 = arith.mulf %116, %117 : vector<4x256xf32>
    %c24_56 = arith.constant 24 : index
    %c0_57 = arith.constant 0 : index
    %119 = vector.load %arg8[%c24_56, %c0_57] : memref<36x256xf32, #tpu.memory_space<vmem>>, vector<4x256xf32>
    tpu.vector_store %arg8[%c24_56, %c0_57], %118 {strides = array<i32>} : memref<36x256xf32, #tpu.memory_space<vmem>>, vector<4x256xf32>,
    %120 = vector.extract_strided_slice %80 {offsets = [0, 16], sizes = [4, 240], strides = [1, 1]} : vector<4x256xf32> to vector<4x240xf32>
    %121 = vector.extract_strided_slice %80 {offsets = [0, 0], sizes = [4, 16], strides = [1, 1]} : vector<4x256xf32> to vector<4x16xf32>
    %122 = tpu.concatenate %120, %121 in 1 : vector<4x240xf32>, vector<4x16xf32> -> vector<4x256xf32>
    %123 = vector.broadcast %19 : vector<1x256xf32> to vector<4x256xf32>
    %124 = arith.mulf %122, %123 : vector<4x256xf32>
    %c28_58 = arith.constant 28 : index
    %c0_59 = arith.constant 0 : index
    %125 = vector.load %arg8[%c28_58, %c0_59] : memref<36x256xf32, #tpu.memory_space<vmem>>, vector<4x256xf32>
    tpu.vector_store %arg8[%c28_58, %c0_59], %124 {strides = array<i32>} : memref<36x256xf32, #tpu.memory_space<vmem>>, vector<4x256xf32>,
    %126 = vector.extract_strided_slice %80 {offsets = [0, 17], sizes = [4, 239], strides = [1, 1]} : vector<4x256xf32> to vector<4x239xf32>
    %127 = vector.extract_strided_slice %80 {offsets = [0, 0], sizes = [4, 17], strides = [1, 1]} : vector<4x256xf32> to vector<4x17xf32>
    %128 = tpu.concatenate %126, %127 in 1 : vector<4x239xf32>, vector<4x17xf32> -> vector<4x256xf32>
    %129 = vector.broadcast %21 : vector<1x256xf32> to vector<4x256xf32>
    %130 = arith.mulf %128, %129 : vector<4x256xf32>
    %c32_60 = arith.constant 32 : index
    %c0_61 = arith.constant 0 : index
    %131 = vector.load %arg8[%c32_60, %c0_61] : memref<36x256xf32, #tpu.memory_space<vmem>>, vector<4x256xf32>
    tpu.vector_store %arg8[%c32_60, %c0_61], %130 {strides = array<i32>} : memref<36x256xf32, #tpu.memory_space<vmem>>, vector<4x256xf32>,
    %c0_62 = arith.constant 0 : index
    %c0_63 = arith.constant 0 : index
    %132 = vector.load %arg8[%c0_62, %c0_63] : memref<36x256xf32, #tpu.memory_space<vmem>>, vector<36x256xf32>
    %cst_64 = arith.constant dense<0.000000e+00> : vector<4x256xf32>
    %133 = tpu.matmul %1, %132, %cst_64 {dimension_numbers = #tpu.dot_dimension_numbers<[1], [0], [0], [1], [0, 0, 1, 1], [], []>} : vector<4x36xf32>, vector<36x256xf32>, vector<4x256xf32> -> vector<4x256xf32>
    %134 = vector.broadcast %3 : vector<4x1xf32> to vector<4x256xf32>
    %135 = arith.addf %133, %134 : vector<4x256xf32>
    %136 = arith.addf %135, %23 : vector<4x256xf32>
    %cst_65 = arith.constant 0.000000e+00 : f32
    %137 = vector.broadcast %cst_65 : f32 to vector<4x256xf32>
    %138 = arith.maximumf %136, %137 : vector<4x256xf32>
    %c0_66 = arith.constant 0 : index
    %c0_67 = arith.constant 0 : index
    %c0_68 = arith.constant 0 : index
    %139 = vector.load %arg7[%c0_66, %c0_67, %c0_68] : memref<2x4x256xf32, #tpu.memory_space<vmem>>, vector<1x4x256xf32>
    %140 = vector.shape_cast %139 : vector<1x4x256xf32> to vector<4x256xf32>
    %141 = vector.shape_cast %138 : vector<4x256xf32> to vector<1x4x256xf32>
    tpu.vector_store %arg7[%c0_66, %c0_67, %c0_68], %141 {strides = array<i32>} : memref<2x4x256xf32, #tpu.memory_space<vmem>>, vector<1x4x256xf32>,
    %c1_69 = arith.constant 1 : index
    %c0_70 = arith.constant 0 : index
    %c0_71 = arith.constant 0 : index
    %142 = vector.load %arg1[%c1_69, %c0_70, %c0_71] : memref<2x4x256xf32, #tpu.memory_space<vmem>>, vector<1x4x256xf32>
    %143 = vector.shape_cast %142 : vector<1x4x256xf32> to vector<4x256xf32>
    %144 = vector.extract_strided_slice %143 {offsets = [0, 239], sizes = [4, 17], strides = [1, 1]} : vector<4x256xf32> to vector<4x17xf32>
    %145 = vector.extract_strided_slice %143 {offsets = [0, 0], sizes = [4, 239], strides = [1, 1]} : vector<4x256xf32> to vector<4x239xf32>
    %146 = tpu.concatenate %144, %145 in 1 : vector<4x17xf32>, vector<4x239xf32> -> vector<4x256xf32>
    %147 = vector.broadcast %5 : vector<1x256xf32> to vector<4x256xf32>
    %148 = arith.mulf %146, %147 : vector<4x256xf32>
    %c0_72 = arith.constant 0 : index
    %c0_73 = arith.constant 0 : index
    %149 = vector.load %arg8[%c0_72, %c0_73] : memref<36x256xf32, #tpu.memory_space<vmem>>, vector<4x256xf32>
    tpu.vector_store %arg8[%c0_72, %c0_73], %148 {strides = array<i32>} : memref<36x256xf32, #tpu.memory_space<vmem>>, vector<4x256xf32>,
    %150 = vector.extract_strided_slice %143 {offsets = [0, 240], sizes = [4, 16], strides = [1, 1]} : vector<4x256xf32> to vector<4x16xf32>
    %151 = vector.extract_strided_slice %143 {offsets = [0, 0], sizes = [4, 240], strides = [1, 1]} : vector<4x256xf32> to vector<4x240xf32>
    %152 = tpu.concatenate %150, %151 in 1 : vector<4x16xf32>, vector<4x240xf32> -> vector<4x256xf32>
    %153 = vector.broadcast %7 : vector<1x256xf32> to vector<4x256xf32>
    %154 = arith.mulf %152, %153 : vector<4x256xf32>
    %c4_74 = arith.constant 4 : index
    %c0_75 = arith.constant 0 : index
    %155 = vector.load %arg8[%c4_74, %c0_75] : memref<36x256xf32, #tpu.memory_space<vmem>>, vector<4x256xf32>
    tpu.vector_store %arg8[%c4_74, %c0_75], %154 {strides = array<i32>} : memref<36x256xf32, #tpu.memory_space<vmem>>, vector<4x256xf32>,
    %156 = vector.extract_strided_slice %143 {offsets = [0, 241], sizes = [4, 15], strides = [1, 1]} : vector<4x256xf32> to vector<4x15xf32>
    %157 = vector.extract_strided_slice %143 {offsets = [0, 0], sizes = [4, 241], strides = [1, 1]} : vector<4x256xf32> to vector<4x241xf32>
    %158 = tpu.concatenate %156, %157 in 1 : vector<4x15xf32>, vector<4x241xf32> -> vector<4x256xf32>
    %159 = vector.broadcast %9 : vector<1x256xf32> to vector<4x256xf32>
    %160 = arith.mulf %158, %159 : vector<4x256xf32>
    %c8_76 = arith.constant 8 : index
    %c0_77 = arith.constant 0 : index
    %161 = vector.load %arg8[%c8_76, %c0_77] : memref<36x256xf32, #tpu.memory_space<vmem>>, vector<4x256xf32>
    tpu.vector_store %arg8[%c8_76, %c0_77], %160 {strides = array<i32>} : memref<36x256xf32, #tpu.memory_space<vmem>>, vector<4x256xf32>,
    %162 = vector.extract_strided_slice %143 {offsets = [0, 255], sizes = [4, 1], strides = [1, 1]} : vector<4x256xf32> to vector<4x1xf32>
    %163 = vector.extract_strided_slice %143 {offsets = [0, 0], sizes = [4, 255], strides = [1, 1]} : vector<4x256xf32> to vector<4x255xf32>
    %164 = tpu.concatenate %162, %163 in 1 : vector<4x1xf32>, vector<4x255xf32> -> vector<4x256xf32>
    %165 = vector.broadcast %11 : vector<1x256xf32> to vector<4x256xf32>
    %166 = arith.mulf %164, %165 : vector<4x256xf32>
    %c12_78 = arith.constant 12 : index
    %c0_79 = arith.constant 0 : index
    %167 = vector.load %arg8[%c12_78, %c0_79] : memref<36x256xf32, #tpu.memory_space<vmem>>, vector<4x256xf32>
    tpu.vector_store %arg8[%c12_78, %c0_79], %166 {strides = array<i32>} : memref<36x256xf32, #tpu.memory_space<vmem>>, vector<4x256xf32>,
    %168 = vector.broadcast %13 : vector<1x256xf32> to vector<4x256xf32>
    %169 = arith.mulf %143, %168 : vector<4x256xf32>
    %c16_80 = arith.constant 16 : index
    %c0_81 = arith.constant 0 : index
    %170 = vector.load %arg8[%c16_80, %c0_81] : memref<36x256xf32, #tpu.memory_space<vmem>>, vector<4x256xf32>
    tpu.vector_store %arg8[%c16_80, %c0_81], %169 {strides = array<i32>} : memref<36x256xf32, #tpu.memory_space<vmem>>, vector<4x256xf32>,
    %171 = vector.extract_strided_slice %143 {offsets = [0, 1], sizes = [4, 255], strides = [1, 1]} : vector<4x256xf32> to vector<4x255xf32>
    %172 = vector.extract_strided_slice %143 {offsets = [0, 0], sizes = [4, 1], strides = [1, 1]} : vector<4x256xf32> to vector<4x1xf32>
    %173 = tpu.concatenate %171, %172 in 1 : vector<4x255xf32>, vector<4x1xf32> -> vector<4x256xf32>
    %174 = vector.broadcast %15 : vector<1x256xf32> to vector<4x256xf32>
    %175 = arith.mulf %173, %174 : vector<4x256xf32>
    %c20_82 = arith.constant 20 : index
    %c0_83 = arith.constant 0 : index
    %176 = vector.load %arg8[%c20_82, %c0_83] : memref<36x256xf32, #tpu.memory_space<vmem>>, vector<4x256xf32>
    tpu.vector_store %arg8[%c20_82, %c0_83], %175 {strides = array<i32>} : memref<36x256xf32, #tpu.memory_space<vmem>>, vector<4x256xf32>,
    %177 = vector.extract_strided_slice %143 {offsets = [0, 15], sizes = [4, 241], strides = [1, 1]} : vector<4x256xf32> to vector<4x241xf32>
    %178 = vector.extract_strided_slice %143 {offsets = [0, 0], sizes = [4, 15], strides = [1, 1]} : vector<4x256xf32> to vector<4x15xf32>
    %179 = tpu.concatenate %177, %178 in 1 : vector<4x241xf32>, vector<4x15xf32> -> vector<4x256xf32>
    %180 = vector.broadcast %17 : vector<1x256xf32> to vector<4x256xf32>
    %181 = arith.mulf %179, %180 : vector<4x256xf32>
    %c24_84 = arith.constant 24 : index
    %c0_85 = arith.constant 0 : index
    %182 = vector.load %arg8[%c24_84, %c0_85] : memref<36x256xf32, #tpu.memory_space<vmem>>, vector<4x256xf32>
    tpu.vector_store %arg8[%c24_84, %c0_85], %181 {strides = array<i32>} : memref<36x256xf32, #tpu.memory_space<vmem>>, vector<4x256xf32>,
    %183 = vector.extract_strided_slice %143 {offsets = [0, 16], sizes = [4, 240], strides = [1, 1]} : vector<4x256xf32> to vector<4x240xf32>
    %184 = vector.extract_strided_slice %143 {offsets = [0, 0], sizes = [4, 16], strides = [1, 1]} : vector<4x256xf32> to vector<4x16xf32>
    %185 = tpu.concatenate %183, %184 in 1 : vector<4x240xf32>, vector<4x16xf32> -> vector<4x256xf32>
    %186 = vector.broadcast %19 : vector<1x256xf32> to vector<4x256xf32>
    %187 = arith.mulf %185, %186 : vector<4x256xf32>
    %c28_86 = arith.constant 28 : index
    %c0_87 = arith.constant 0 : index
    %188 = vector.load %arg8[%c28_86, %c0_87] : memref<36x256xf32, #tpu.memory_space<vmem>>, vector<4x256xf32>
    tpu.vector_store %arg8[%c28_86, %c0_87], %187 {strides = array<i32>} : memref<36x256xf32, #tpu.memory_space<vmem>>, vector<4x256xf32>,
    %189 = vector.extract_strided_slice %143 {offsets = [0, 17], sizes = [4, 239], strides = [1, 1]} : vector<4x256xf32> to vector<4x239xf32>
    %190 = vector.extract_strided_slice %143 {offsets = [0, 0], sizes = [4, 17], strides = [1, 1]} : vector<4x256xf32> to vector<4x17xf32>
    %191 = tpu.concatenate %189, %190 in 1 : vector<4x239xf32>, vector<4x17xf32> -> vector<4x256xf32>
    %192 = vector.broadcast %21 : vector<1x256xf32> to vector<4x256xf32>
    %193 = arith.mulf %191, %192 : vector<4x256xf32>
    %c32_88 = arith.constant 32 : index
    %c0_89 = arith.constant 0 : index
    %194 = vector.load %arg8[%c32_88, %c0_89] : memref<36x256xf32, #tpu.memory_space<vmem>>, vector<4x256xf32>
    tpu.vector_store %arg8[%c32_88, %c0_89], %193 {strides = array<i32>} : memref<36x256xf32, #tpu.memory_space<vmem>>, vector<4x256xf32>,
    %c0_90 = arith.constant 0 : index
    %c0_91 = arith.constant 0 : index
    %195 = vector.load %arg8[%c0_90, %c0_91] : memref<36x256xf32, #tpu.memory_space<vmem>>, vector<36x256xf32>
    %cst_92 = arith.constant dense<0.000000e+00> : vector<4x256xf32>
    %196 = tpu.matmul %0, %195, %cst_92 {dimension_numbers = #tpu.dot_dimension_numbers<[1], [0], [0], [1], [0, 0, 1, 1], [], []>} : vector<4x36xf32>, vector<36x256xf32>, vector<4x256xf32> -> vector<4x256xf32>
    %197 = vector.broadcast %2 : vector<4x1xf32> to vector<4x256xf32>
    %198 = arith.addf %196, %197 : vector<4x256xf32>
    %cst_93 = arith.constant 0.000000e+00 : f32
    %199 = vector.broadcast %cst_93 : f32 to vector<4x256xf32>
    %200 = arith.maximumf %198, %199 : vector<4x256xf32>
    %201 = vector.extract_strided_slice %200 {offsets = [0, 239], sizes = [4, 17], strides = [1, 1]} : vector<4x256xf32> to vector<4x17xf32>
    %202 = vector.extract_strided_slice %200 {offsets = [0, 0], sizes = [4, 239], strides = [1, 1]} : vector<4x256xf32> to vector<4x239xf32>
    %203 = tpu.concatenate %201, %202 in 1 : vector<4x17xf32>, vector<4x239xf32> -> vector<4x256xf32>
    %204 = vector.broadcast %5 : vector<1x256xf32> to vector<4x256xf32>
    %205 = arith.mulf %203, %204 : vector<4x256xf32>
    %c0_94 = arith.constant 0 : index
    %c0_95 = arith.constant 0 : index
    %206 = vector.load %arg8[%c0_94, %c0_95] : memref<36x256xf32, #tpu.memory_space<vmem>>, vector<4x256xf32>
    tpu.vector_store %arg8[%c0_94, %c0_95], %205 {strides = array<i32>} : memref<36x256xf32, #tpu.memory_space<vmem>>, vector<4x256xf32>,
    %207 = vector.extract_strided_slice %200 {offsets = [0, 240], sizes = [4, 16], strides = [1, 1]} : vector<4x256xf32> to vector<4x16xf32>
    %208 = vector.extract_strided_slice %200 {offsets = [0, 0], sizes = [4, 240], strides = [1, 1]} : vector<4x256xf32> to vector<4x240xf32>
    %209 = tpu.concatenate %207, %208 in 1 : vector<4x16xf32>, vector<4x240xf32> -> vector<4x256xf32>
    %210 = vector.broadcast %7 : vector<1x256xf32> to vector<4x256xf32>
    %211 = arith.mulf %209, %210 : vector<4x256xf32>
    %c4_96 = arith.constant 4 : index
    %c0_97 = arith.constant 0 : index
    %212 = vector.load %arg8[%c4_96, %c0_97] : memref<36x256xf32, #tpu.memory_space<vmem>>, vector<4x256xf32>
    tpu.vector_store %arg8[%c4_96, %c0_97], %211 {strides = array<i32>} : memref<36x256xf32, #tpu.memory_space<vmem>>, vector<4x256xf32>,
    %213 = vector.extract_strided_slice %200 {offsets = [0, 241], sizes = [4, 15], strides = [1, 1]} : vector<4x256xf32> to vector<4x15xf32>
    %214 = vector.extract_strided_slice %200 {offsets = [0, 0], sizes = [4, 241], strides = [1, 1]} : vector<4x256xf32> to vector<4x241xf32>
    %215 = tpu.concatenate %213, %214 in 1 : vector<4x15xf32>, vector<4x241xf32> -> vector<4x256xf32>
    %216 = vector.broadcast %9 : vector<1x256xf32> to vector<4x256xf32>
    %217 = arith.mulf %215, %216 : vector<4x256xf32>
    %c8_98 = arith.constant 8 : index
    %c0_99 = arith.constant 0 : index
    %218 = vector.load %arg8[%c8_98, %c0_99] : memref<36x256xf32, #tpu.memory_space<vmem>>, vector<4x256xf32>
    tpu.vector_store %arg8[%c8_98, %c0_99], %217 {strides = array<i32>} : memref<36x256xf32, #tpu.memory_space<vmem>>, vector<4x256xf32>,
    %219 = vector.extract_strided_slice %200 {offsets = [0, 255], sizes = [4, 1], strides = [1, 1]} : vector<4x256xf32> to vector<4x1xf32>
    %220 = vector.extract_strided_slice %200 {offsets = [0, 0], sizes = [4, 255], strides = [1, 1]} : vector<4x256xf32> to vector<4x255xf32>
    %221 = tpu.concatenate %219, %220 in 1 : vector<4x1xf32>, vector<4x255xf32> -> vector<4x256xf32>
    %222 = vector.broadcast %11 : vector<1x256xf32> to vector<4x256xf32>
    %223 = arith.mulf %221, %222 : vector<4x256xf32>
    %c12_100 = arith.constant 12 : index
    %c0_101 = arith.constant 0 : index
    %224 = vector.load %arg8[%c12_100, %c0_101] : memref<36x256xf32, #tpu.memory_space<vmem>>, vector<4x256xf32>
    tpu.vector_store %arg8[%c12_100, %c0_101], %223 {strides = array<i32>} : memref<36x256xf32, #tpu.memory_space<vmem>>, vector<4x256xf32>,
    %225 = vector.broadcast %13 : vector<1x256xf32> to vector<4x256xf32>
    %226 = arith.mulf %200, %225 : vector<4x256xf32>
    %c16_102 = arith.constant 16 : index
    %c0_103 = arith.constant 0 : index
    %227 = vector.load %arg8[%c16_102, %c0_103] : memref<36x256xf32, #tpu.memory_space<vmem>>, vector<4x256xf32>
    tpu.vector_store %arg8[%c16_102, %c0_103], %226 {strides = array<i32>} : memref<36x256xf32, #tpu.memory_space<vmem>>, vector<4x256xf32>,
    %228 = vector.extract_strided_slice %200 {offsets = [0, 1], sizes = [4, 255], strides = [1, 1]} : vector<4x256xf32> to vector<4x255xf32>
    %229 = vector.extract_strided_slice %200 {offsets = [0, 0], sizes = [4, 1], strides = [1, 1]} : vector<4x256xf32> to vector<4x1xf32>
    %230 = tpu.concatenate %228, %229 in 1 : vector<4x255xf32>, vector<4x1xf32> -> vector<4x256xf32>
    %231 = vector.broadcast %15 : vector<1x256xf32> to vector<4x256xf32>
    %232 = arith.mulf %230, %231 : vector<4x256xf32>
    %c20_104 = arith.constant 20 : index
    %c0_105 = arith.constant 0 : index
    %233 = vector.load %arg8[%c20_104, %c0_105] : memref<36x256xf32, #tpu.memory_space<vmem>>, vector<4x256xf32>
    tpu.vector_store %arg8[%c20_104, %c0_105], %232 {strides = array<i32>} : memref<36x256xf32, #tpu.memory_space<vmem>>, vector<4x256xf32>,
    %234 = vector.extract_strided_slice %200 {offsets = [0, 15], sizes = [4, 241], strides = [1, 1]} : vector<4x256xf32> to vector<4x241xf32>
    %235 = vector.extract_strided_slice %200 {offsets = [0, 0], sizes = [4, 15], strides = [1, 1]} : vector<4x256xf32> to vector<4x15xf32>
    %236 = tpu.concatenate %234, %235 in 1 : vector<4x241xf32>, vector<4x15xf32> -> vector<4x256xf32>
    %237 = vector.broadcast %17 : vector<1x256xf32> to vector<4x256xf32>
    %238 = arith.mulf %236, %237 : vector<4x256xf32>
    %c24_106 = arith.constant 24 : index
    %c0_107 = arith.constant 0 : index
    %239 = vector.load %arg8[%c24_106, %c0_107] : memref<36x256xf32, #tpu.memory_space<vmem>>, vector<4x256xf32>
    tpu.vector_store %arg8[%c24_106, %c0_107], %238 {strides = array<i32>} : memref<36x256xf32, #tpu.memory_space<vmem>>, vector<4x256xf32>,
    %240 = vector.extract_strided_slice %200 {offsets = [0, 16], sizes = [4, 240], strides = [1, 1]} : vector<4x256xf32> to vector<4x240xf32>
    %241 = vector.extract_strided_slice %200 {offsets = [0, 0], sizes = [4, 16], strides = [1, 1]} : vector<4x256xf32> to vector<4x16xf32>
    %242 = tpu.concatenate %240, %241 in 1 : vector<4x240xf32>, vector<4x16xf32> -> vector<4x256xf32>
    %243 = vector.broadcast %19 : vector<1x256xf32> to vector<4x256xf32>
    %244 = arith.mulf %242, %243 : vector<4x256xf32>
    %c28_108 = arith.constant 28 : index
    %c0_109 = arith.constant 0 : index
    %245 = vector.load %arg8[%c28_108, %c0_109] : memref<36x256xf32, #tpu.memory_space<vmem>>, vector<4x256xf32>
    tpu.vector_store %arg8[%c28_108, %c0_109], %244 {strides = array<i32>} : memref<36x256xf32, #tpu.memory_space<vmem>>, vector<4x256xf32>,
    %246 = vector.extract_strided_slice %200 {offsets = [0, 17], sizes = [4, 239], strides = [1, 1]} : vector<4x256xf32> to vector<4x239xf32>
    %247 = vector.extract_strided_slice %200 {offsets = [0, 0], sizes = [4, 17], strides = [1, 1]} : vector<4x256xf32> to vector<4x17xf32>
    %248 = tpu.concatenate %246, %247 in 1 : vector<4x239xf32>, vector<4x17xf32> -> vector<4x256xf32>
    %249 = vector.broadcast %21 : vector<1x256xf32> to vector<4x256xf32>
    %250 = arith.mulf %248, %249 : vector<4x256xf32>
    %c32_110 = arith.constant 32 : index
    %c0_111 = arith.constant 0 : index
    %251 = vector.load %arg8[%c32_110, %c0_111] : memref<36x256xf32, #tpu.memory_space<vmem>>, vector<4x256xf32>
    tpu.vector_store %arg8[%c32_110, %c0_111], %250 {strides = array<i32>} : memref<36x256xf32, #tpu.memory_space<vmem>>, vector<4x256xf32>,
    %c0_112 = arith.constant 0 : index
    %c0_113 = arith.constant 0 : index
    %252 = vector.load %arg8[%c0_112, %c0_113] : memref<36x256xf32, #tpu.memory_space<vmem>>, vector<36x256xf32>
    %cst_114 = arith.constant dense<0.000000e+00> : vector<4x256xf32>
    %253 = tpu.matmul %1, %252, %cst_114 {dimension_numbers = #tpu.dot_dimension_numbers<[1], [0], [0], [1], [0, 0, 1, 1], [], []>} : vector<4x36xf32>, vector<36x256xf32>, vector<4x256xf32> -> vector<4x256xf32>
    %254 = vector.broadcast %3 : vector<4x1xf32> to vector<4x256xf32>
    %255 = arith.addf %253, %254 : vector<4x256xf32>
    %256 = arith.addf %255, %143 : vector<4x256xf32>
    %cst_115 = arith.constant 0.000000e+00 : f32
    %257 = vector.broadcast %cst_115 : f32 to vector<4x256xf32>
    %258 = arith.maximumf %256, %257 : vector<4x256xf32>
    %c1_116 = arith.constant 1 : index
    %c0_117 = arith.constant 0 : index
    %c0_118 = arith.constant 0 : index
    %259 = vector.load %arg7[%c1_116, %c0_117, %c0_118] : memref<2x4x256xf32, #tpu.memory_space<vmem>>, vector<1x4x256xf32>
    %260 = vector.shape_cast %259 : vector<1x4x256xf32> to vector<4x256xf32>
    %261 = vector.shape_cast %258 : vector<4x256xf32> to vector<1x4x256xf32>
    tpu.vector_store %arg7[%c1_116, %c0_117, %c0_118], %261 {strides = array<i32>} : memref<2x4x256xf32, #tpu.memory_space<vmem>>, vector<1x4x256xf32>,
    return
  }
  func.func @transform_0(%arg0: i32) -> (i32, i32, i32) {
    %c0_i32 = arith.constant 0 : i32
    %c0_i32_0 = arith.constant 0 : i32
    %c0_i32_1 = arith.constant 0 : i32
    %c0_i32_2 = arith.constant 0 : i32
    return %c0_i32, %c0_i32_0, %c0_i32_1 : i32, i32, i32
  }
  func.func @transform_1(%arg0: i32) -> (i32, i32) {
    %c0_i32 = arith.constant 0 : i32
    %c0_i32_0 = arith.constant 0 : i32
    %c0_i32_1 = arith.constant 0 : i32
    return %c0_i32, %c0_i32_0 : i32, i32
  }
  func.func @transform_2(%arg0: i32) -> (i32, i32) {
    %c0_i32 = arith.constant 0 : i32
    %c0_i32_0 = arith.constant 0 : i32
    %c0_i32_1 = arith.constant 0 : i32
    return %c0_i32, %c0_i32_0 : i32, i32
  }
  func.func @transform_3(%arg0: i32) -> (i32, i32) {
    %c0_i32 = arith.constant 0 : i32
    %c0_i32_0 = arith.constant 0 : i32
    %c0_i32_1 = arith.constant 0 : i32
    return %c0_i32, %c0_i32_0 : i32, i32
  }
  func.func @transform_4(%arg0: i32) -> (i32, i32) {
    %c0_i32 = arith.constant 0 : i32
    %c0_i32_0 = arith.constant 0 : i32
    %c0_i32_1 = arith.constant 0 : i32
    return %c0_i32, %c0_i32_0 : i32, i32
  }
  func.func @transform_5(%arg0: i32) -> (i32, i32, i32) {
    %c0_i32 = arith.constant 0 : i32
    %c0_i32_0 = arith.constant 0 : i32
    %c0_i32_1 = arith.constant 0 : i32
    %c0_i32_2 = arith.constant 0 : i32
    return %c0_i32, %c0_i32_0, %c0_i32_1 : i32, i32, i32
  }
  func.func @transform_6(%arg0: i32) -> (i32, i32, i32) {
    %c0_i32 = arith.constant 0 : i32
    %c0_i32_0 = arith.constant 0 : i32
    %c0_i32_1 = arith.constant 0 : i32
    %c0_i32_2 = arith.constant 0 : i32
    return %c0_i32, %c0_i32_0, %c0_i32_1 : i32, i32, i32
  }
}

</mosaic_0001>

<llo_original>
// kernel: residual_block_forward.1
$region0: #{residual_block_forward.1}
  #allocation0 [shape = 'u32[]', space=smem, size = 0x4, offset = 0x4, fixed_abs, tag = 'smem constant byte address 0x4 - core index']
  #allocation1 [shape = 'u32[72,128]{1,0:T(1,128)}', space=vmem, size = 0x9000, scoped, tag = 'internal scratch']
  #allocation2 [shape = 'f32[36,256]{1,0:T(8,128)}', space=vmem, size = 0xa000, scoped, tag = 'scratch operand']
  %s0 = inlined_call_operand.vmem [shape: f32[2,4,256], index: 0, kind: input, shape index: {}]
  %s1 = inlined_call_operand.vmem [shape: f32[4,36], index: 1, kind: input, shape index: {}]
  %s2 = inlined_call_operand.vmem [shape: f32[4,1], index: 2, kind: input, shape index: {}]
  %s3 = inlined_call_operand.vmem [shape: f32[4,36], index: 3, kind: input, shape index: {}]
  %s4 = inlined_call_operand.vmem [shape: f32[4,1], index: 4, kind: input, shape index: {}]
  %s5 = inlined_call_operand.vmem [shape: f32[9,1,256], index: 5, kind: input, shape index: {}]
  %s6 = inlined_call_operand.vmem [shape: f32[2,4,256], index: 6, kind: output, shape index: {}]
  %s7 = sld [smem:[#allocation0]]
  $region34: #{residual_block_forward.1} parent=0
    _
  %s9 = ssub.s32 1, %s7
  %s10 = scalar_select 0, %s9, %s7
  // Predicated region
  $region2: #{residual_block_forward.1} parent=0 // pred_check
    _
  $region3: #{residual_block_forward.1} parent=0 // pred_check_branch
    %12 = sbr.rel (0) target = $region5
  $region4: #{residual_block_forward.1} parent=0 // pred_region
    _
  $region5: #{residual_block_forward.1} parent=0 // pred_fallthru
    _
  // Predicated region
  $region6: #{residual_block_forward.1} parent=0 // pred_check
    _
  $region7: #{residual_block_forward.1} parent=0 // pred_check_branch
    %14 = sbr.rel (0) target = $region9
  $region8: #{residual_block_forward.1} parent=0 // pred_region
    _
  $region9: #{residual_block_forward.1} parent=0 // pred_fallthru
    _
  // Predicated region
  $region10: #{residual_block_forward.1} parent=0 // pred_check
    _
  $region11: #{residual_block_forward.1} parent=0 // pred_check_branch
    %16 = sbr.rel (0) target = $region13
  $region12: #{residual_block_forward.1} parent=0 // pred_region
    _
  $region13: #{residual_block_forward.1} parent=0 // pred_fallthru
    _
  // Predicated region
  $region14: #{residual_block_forward.1} parent=0 // pred_check
    _
  $region15: #{residual_block_forward.1} parent=0 // pred_check_branch
    %18 = sbr.rel (0) target = $region17
  $region16: #{residual_block_forward.1} parent=0 // pred_region
    _
  $region17: #{residual_block_forward.1} parent=0 // pred_fallthru
    _
  // Predicated region
  $region18: #{residual_block_forward.1} parent=0 // pred_check
    _
  $region19: #{residual_block_forward.1} parent=0 // pred_check_branch
    %20 = sbr.rel (0) target = $region21
  $region20: #{residual_block_forward.1} parent=0 // pred_region
    _
  $region21: #{residual_block_forward.1} parent=0 // pred_fallthru
    _
  // Predicated region
  $region22: #{residual_block_forward.1} parent=0 // pred_check
    _
  $region23: #{residual_block_forward.1} parent=0 // pred_check_branch
    %22 = sbr.rel (0) target = $region25
  $region24: #{residual_block_forward.1} parent=0 // pred_region
    _
  $region25: #{residual_block_forward.1} parent=0 // pred_fallthru
    _
  %v23 = vld [vmem:[%s1] sm:$0xf]
  %v24 = vld [vmem:[%s3] sm:$0xf]
  %v25 = vld [vmem:[%s2] sm:$0xf]
  %v26 = vld [vmem:[%s4] sm:$0xf]
  %v27 = vld [vmem:[%s5] sm:$0x3]
  %s28 = scalar_lea.vmem %s5, 2
  %v29 = vld [vmem:[%s28] sm:$0x3]
  %s30 = scalar_lea.vmem %s5, 4
  %v31 = vld [vmem:[%s30] sm:$0x3]
  %s32 = scalar_lea.vmem %s5, 6
  %v33 = vld [vmem:[%s32] sm:$0x3]
  %s34 = scalar_lea.vmem %s5, 8
  %v35 = vld [vmem:[%s34] sm:$0x3]
  %s36 = scalar_lea.vmem %s5, 10
  %v37 = vld [vmem:[%s36] sm:$0x3]
  %s38 = scalar_lea.vmem %s5, 12
  %v39 = vld [vmem:[%s38] sm:$0x3]
  %s40 = scalar_lea.vmem %s5, 14
  %v41 = vld [vmem:[%s40] sm:$0x3]
  %s42 = scalar_lea.vmem %s5, 16
  %v43 = vld [vmem:[%s42] sm:$0x3]
  %v44 = vld [vmem:[%s0] sm:$0xff]
  %46 = vst [vmem:[#allocation1] ss:$2 sm:$0xff] %v44
  %v47 = vld.sshfl [vmem:[#allocation1 + $0x8] sm:$0xff pattern:$0x75316420]
  %48 = vrot.lane.b32.xlu0 %v47, 17
  %v49 = vpop.permute.xlu0 %48
  %51 = vst [vmem:[#allocation1] ss:$2 sm:$0xff] %v44
  %v52 = vld.sshfl [vmem:[#allocation1] sm:$0xff pattern:$0x75316420]
  %v53 = vld.sshfl [vmem:[#allocation1 + $0x8] sm:$0xff pattern:$0x75316420]
  %54 = vrot.lane.b32.xlu0 %v52, 17
  %v55 = vpop.permute.xlu0 %54
  %56 = vrot.lane.b32.xlu0 %v53, 17
  %v57 = vpop.permute.xlu0 %56
  %vm58 = vcmask 138240
  %v59 = vsel %vm58, %v55, %v57
  %v62 = vsel %vm58, %v49, %v55
  %v64 = vperm.slane %v27, 0
  %v65 = vperm.slane %v27, 1
  %v68 = vmul.f32 %v62, %v64
  %v69 = vmul.f32 %v59, %v65
  %70 = vst [vmem:[#allocation2] sm:$0xf] %v68
  %71 = vst [vmem:[#allocation2 + $0x8] sm:$0xf] %v69
  %72 = vst [vmem:[#allocation1] ss:$2 sm:$0xff] %v44
  %v73 = vld.sshfl [vmem:[#allocation1 + $0x8] sm:$0xff pattern:$0x75316420]
  %74 = vrot.lane.b32.xlu0 %v73, 16
  %v75 = vpop.permute.xlu0 %74
  %77 = vst [vmem:[#allocation1] ss:$2 sm:$0xff] %v44
  %v78 = vld.sshfl [vmem:[#allocation1] sm:$0xff pattern:$0x75316420]
  %v79 = vld.sshfl [vmem:[#allocation1 + $0x8] sm:$0xff pattern:$0x75316420]
  %80 = vrot.lane.b32.xlu0 %v78, 16
  %v81 = vpop.permute.xlu0 %80
  %82 = vrot.lane.b32.xlu0 %v79, 16
  %v83 = vpop.permute.xlu0 %82
  %vm84 = vcmask 130048
  %v85 = vsel %vm84, %v81, %v83
  %v88 = vsel %vm84, %v75, %v81
  %v90 = vperm.slane %v29, 0
  %v91 = vperm.slane %v29, 1
  %v94 = vmul.f32 %v88, %v90
  %v95 = vmul.f32 %v85, %v91
  %v98 = vrot.slane %v94, 4
  %v99 = vrot.slane %v95, 4
  %102 = vst [vmem:[#allocation2] sm:$0xf0] %v98
  %103 = vst [vmem:[#allocation2 + $0x8] sm:$0xf0] %v99
  %104 = vst [vmem:[#allocation1] ss:$2 sm:$0xff] %v44
  %v105 = vld.sshfl [vmem:[#allocation1 + $0x8] sm:$0xff pattern:$0x75316420]
  %106 = vrot.lane.b32.xlu0 %v105, 15
  %v107 = vpop.permute.xlu0 %106
  %109 = vst [vmem:[#allocation1] ss:$2 sm:$0xff] %v44
  %v110 = vld.sshfl [vmem:[#allocation1] sm:$0xff pattern:$0x75316420]
  %v111 = vld.sshfl [vmem:[#allocation1 + $0x8] sm:$0xff pattern:$0x75316420]
  %112 = vrot.lane.b32.xlu0 %v110, 15
  %v113 = vpop.permute.xlu0 %112
  %114 = vrot.lane.b32.xlu0 %v111, 15
  %v115 = vpop.permute.xlu0 %114
  %vm116 = vcmask 121856
  %v117 = vsel %vm116, %v113, %v115
  %v120 = vsel %vm116, %v107, %v113
  %v122 = vperm.slane %v31, 0
  %v123 = vperm.slane %v31, 1
  %v126 = vmul.f32 %v120, %v122
  %v127 = vmul.f32 %v117, %v123
  %128 = vst [vmem:[#allocation2 + $0x10] sm:$0xf] %v126
  %129 = vst [vmem:[#allocation2 + $0x18] sm:$0xf] %v127
  %130 = vst [vmem:[#allocation1] ss:$2 sm:$0xff] %v44
  %v131 = vld.sshfl [vmem:[#allocation1 + $0x8] sm:$0xff pattern:$0x75316420]
  %132 = vrot.lane.b32.xlu0 %v131, 1
  %v133 = vpop.permute.xlu0 %132
  %135 = vst [vmem:[#allocation1] ss:$2 sm:$0xff] %v44
  %v136 = vld.sshfl [vmem:[#allocation1] sm:$0xff pattern:$0x75316420]
  %v137 = vld.sshfl [vmem:[#allocation1 + $0x8] sm:$0xff pattern:$0x75316420]
  %138 = vrot.lane.b32.xlu0 %v136, 1
  %v139 = vpop.permute.xlu0 %138
  %140 = vrot.lane.b32.xlu0 %v137, 1
  %v141 = vpop.permute.xlu0 %140
  %vm142 = vcmask 7168
  %v143 = vsel %vm142, %v139, %v141
  %v146 = vsel %vm142, %v133, %v139
  %v148 = vperm.slane %v33, 0
  %v149 = vperm.slane %v33, 1
  %v152 = vmul.f32 %v146, %v148
  %v153 = vmul.f32 %v143, %v149
  %v156 = vrot.slane %v152, 4
  %v157 = vrot.slane %v153, 4
  %160 = vst [vmem:[#allocation2 + $0x10] sm:$0xf0] %v156
  %161 = vst [vmem:[#allocation2 + $0x18] sm:$0xf0] %v157
  %v163 = vperm.slane %v35, 0
  %v164 = vperm.slane %v35, 1
  %v167 = vrot.slane %v164, 4
  %vm168 = vcmask 1043456
  %v169 = vsel %vm168, %v163, %v167
  %v171 = vmul.f32 %v44, %v169
  %173 = vst [vmem:[#allocation1] ss:$2 sm:$0xff] %v171
  %v174 = vld.sshfl [vmem:[#allocation1] sm:$0xff pattern:$0x75316420]
  %v175 = vld.sshfl [vmem:[#allocation1 + $0x8] sm:$0xff pattern:$0x75316420]
  %178 = vst [vmem:[#allocation2 + $0x20] sm:$0xf] %v174
  %179 = vst [vmem:[#allocation2 + $0x28] sm:$0xf] %v175
  %180 = vst [vmem:[#allocation1] ss:$2 sm:$0xff] %v44
  %v181 = vld.sshfl [vmem:[#allocation1] sm:$0xff pattern:$0x75316420]
  %v182 = vld.sshfl [vmem:[#allocation1 + $0x8] sm:$0xff pattern:$0x75316420]
  %183 = vrot.lane.b32.xlu0 %v181, 127
  %v184 = vpop.permute.xlu0 %183
  %185 = vrot.lane.b32.xlu0 %v182, 127
  %v186 = vpop.permute.xlu0 %185
  %vm187 = vcmask 1039360
  %v188 = vsel %vm187, %v184, %v186
  %191 = vst [vmem:[#allocation1] ss:$2 sm:$0xff] %v44
  %v192 = vld.sshfl [vmem:[#allocation1] sm:$0xff pattern:$0x75316420]
  %193 = vrot.lane.b32.xlu0 %v192, 127
  %v194 = vpop.permute.xlu0 %193
  %v196 = vsel %vm187, %v186, %v194
  %v198 = vperm.slane %v37, 0
  %v199 = vperm.slane %v37, 1
  %v202 = vmul.f32 %v188, %v198
  %v203 = vmul.f32 %v196, %v199
  %v206 = vrot.slane %v202, 4
  %v207 = vrot.slane %v203, 4
  %210 = vst [vmem:[#allocation2 + $0x20] sm:$0xf0] %v206
  %211 = vst [vmem:[#allocation2 + $0x28] sm:$0xf0] %v207
  %212 = vst [vmem:[#allocation1] ss:$2 sm:$0xff] %v44
  %v213 = vld.sshfl [vmem:[#allocation1] sm:$0xff pattern:$0x75316420]
  %v214 = vld.sshfl [vmem:[#allocation1 + $0x8] sm:$0xff pattern:$0x75316420]
  %215 = vrot.lane.b32.xlu0 %v213, 113
  %v216 = vpop.permute.xlu0 %215
  %217 = vrot.lane.b32.xlu0 %v214, 113
  %v218 = vpop.permute.xlu0 %217
  %vm219 = vcmask 924672
  %v220 = vsel %vm219, %v216, %v218
  %223 = vst [vmem:[#allocation1] ss:$2 sm:$0xff] %v44
  %v224 = vld.sshfl [vmem:[#allocation1] sm:$0xff pattern:$0x75316420]
  %225 = vrot.lane.b32.xlu0 %v224, 113
  %v226 = vpop.permute.xlu0 %225
  %v228 = vsel %vm219, %v218, %v226
  %v230 = vperm.slane %v39, 0
  %v231 = vperm.slane %v39, 1
  %v234 = vmul.f32 %v220, %v230
  %v235 = vmul.f32 %v228, %v231
  %236 = vst [vmem:[#allocation2 + $0x30] sm:$0xf] %v234
  %237 = vst [vmem:[#allocation2 + $0x38] sm:$0xf] %v235
  %238 = vst [vmem:[#allocation1] ss:$2 sm:$0xff] %v44
  %v239 = vld.sshfl [vmem:[#allocation1] sm:$0xff pattern:$0x75316420]
  %v240 = vld.sshfl [vmem:[#allocation1 + $0x8] sm:$0xff pattern:$0x75316420]
  %241 = vrot.lane.b32.xlu0 %v239, 112
  %v242 = vpop.permute.xlu0 %241
  %243 = vrot.lane.b32.xlu0 %v240, 112
  %v244 = vpop.permute.xlu0 %243
  %vm245 = vcmask 916480
  %v246 = vsel %vm245, %v242, %v244
  %249 = vst [vmem:[#allocation1] ss:$2 sm:$0xff] %v44
  %v250 = vld.sshfl [vmem:[#allocation1] sm:$0xff pattern:$0x75316420]
  %251 = vrot.lane.b32.xlu0 %v250, 112
  %v252 = vpop.permute.xlu0 %251
  %v254 = vsel %vm245, %v244, %v252
  %v256 = vperm.slane %v41, 0
  %v257 = vperm.slane %v41, 1
  %v260 = vmul.f32 %v246, %v256
  %v261 = vmul.f32 %v254, %v257
  %v264 = vrot.slane %v260, 4
  %v265 = vrot.slane %v261, 4
  %268 = vst [vmem:[#allocation2 + $0x30] sm:$0xf0] %v264
  %269 = vst [vmem:[#allocation2 + $0x38] sm:$0xf0] %v265
  %270 = vst [vmem:[#allocation1] ss:$2 sm:$0xff] %v44
  %v271 = vld.sshfl [vmem:[#allocation1] sm:$0xff pattern:$0x75316420]
  %v272 = vld.sshfl [vmem:[#allocation1 + $0x8] sm:$0xff pattern:$0x75316420]
  %273 = vrot.lane.b32.xlu0 %v271, 111
  %v274 = vpop.permute.xlu0 %273
  %275 = vrot.lane.b32.xlu0 %v272, 111
  %v276 = vpop.permute.xlu0 %275
  %vm277 = vcmask 908288
  %v278 = vsel %vm277, %v274, %v276
  %281 = vst [vmem:[#allocation1] ss:$2 sm:$0xff] %v44
  %v282 = vld.sshfl [vmem:[#allocation1] sm:$0xff pattern:$0x75316420]
  %283 = vrot.lane.b32.xlu0 %v282, 111
  %v284 = vpop.permute.xlu0 %283
  %v286 = vsel %vm277, %v276, %v284
  %v288 = vperm.slane %v43, 0
  %v289 = vperm.slane %v43, 1
  %v292 = vmul.f32 %v278, %v288
  %v293 = vmul.f32 %v286, %v289
  %294 = vst [vmem:[#allocation2 + $0x40] sm:$0xf] %v292
  %295 = vst [vmem:[#allocation2 + $0x48] sm:$0xf] %v293
  %v296 = vld [vmem:[#allocation2] sm:$0xff]
  %v297 = vld [vmem:[#allocation2 + $0x8] sm:$0xff]
  %v298 = vld [vmem:[#allocation2 + $0x10] sm:$0xff]
  %v299 = vld [vmem:[#allocation2 + $0x18] sm:$0xff]
  %v300 = vld [vmem:[#allocation2 + $0x20] sm:$0xff]
  %v301 = vld [vmem:[#allocation2 + $0x28] sm:$0xff]
  %v302 = vld [vmem:[#allocation2 + $0x30] sm:$0xff]
  %v303 = vld [vmem:[#allocation2 + $0x38] sm:$0xff]
  %v304 = vld [vmem:[#allocation2 + $0x40] sm:$0xf]
  %v305 = vld [vmem:[#allocation2 + $0x48] sm:$0xf]
  %307 = vset.pattern.permute.xlu0 0
  %308 = vperm.xlu0 %307, %v25
  %v309 = vpop.permute.xlu0 %308
  %vm311 = vcmask 293888
  %v313 = vsel %vm311, %v23, 0
  %v316 = vsel %vm168, %v304, 0
  %v319 = vsel %vm168, %v305, 0
  %321 = vmatpush.msra.mxu0 0.0
  %322 = vmatpush.msra.mxu0 0.0
  %323 = vmatpush.msra.mxu0 0.0
  %324 = vmatpush.msra.mxu0 0.0
  %325 = vmatpush.msra.mxu0 0.0
  %326 = vmatpush.msra.mxu0 0.0
  %327 = vmatpush.msra.mxu0 0.0
  %328 = vmatpush.msra.mxu0 0.0
  %329 = vmatpush.msra.mxu0 0.0
  %330 = vmatpush.msra.mxu0 0.0
  %331 = vmatpush.msra.mxu0 0.0
  %332 = vmatpush.msra.mxu0 %v316
  %333 = vmatpush.msra.mxu0 %v302
  %334 = vmatpush.msra.mxu0 %v300
  %335 = vmatpush.msra.mxu0 %v298
  %336 = vmatpush.msra.mxu0 %v296
  %337 = vmatmul.f32.gmra.mxu0 %v313
  %v338 = vpop.f32.mrf.mxu0
  %v339 = vadd.f32 %v309, %v338
  %340 = vdwg.mxu0
  %341 = vmatpush.msra.mxu0 0.0
  %342 = vmatpush.msra.mxu0 0.0
  %343 = vmatpush.msra.mxu0 0.0
  %344 = vmatpush.msra.mxu0 0.0
  %345 = vmatpush.msra.mxu0 0.0
  %346 = vmatpush.msra.mxu0 0.0
  %347 = vmatpush.msra.mxu0 0.0
  %348 = vmatpush.msra.mxu0 0.0
  %349 = vmatpush.msra.mxu0 0.0
  %350 = vmatpush.msra.mxu0 0.0
  %351 = vmatpush.msra.mxu0 0.0
  %352 = vmatpush.msra.mxu0 %v319
  %353 = vmatpush.msra.mxu0 %v303
  %354 = vmatpush.msra.mxu0 %v301
  %355 = vmatpush.msra.mxu0 %v299
  %356 = vmatpush.msra.mxu0 %v297
  %357 = vmatmul.f32.gmra.mxu0 %v313
  %v358 = vpop.f32.mrf.mxu0
  %v359 = vadd.f32 %v309, %v358
  %360 = vdwg.mxu0
  %v361 = vmax.f32 %v339, 0.0
  %v362 = vmax.f32 %v359, 0.0
  %364 = vrot.lane.b32.xlu0 %v362, 17
  %v365 = vpop.permute.xlu0 %364
  %368 = vrot.lane.b32.xlu0 %v361, 17
  %v369 = vpop.permute.xlu0 %368
  %v370 = vsel %vm58, %v369, %v365
  %v373 = vsel %vm58, %v365, %v369
  %v374 = vmul.f32 %v373, %v64
  %v375 = vmul.f32 %v370, %v65
  %376 = vst [vmem:[#allocation2] sm:$0xf] %v374
  %377 = vst [vmem:[#allocation2 + $0x8] sm:$0xf] %v375
  %378 = vrot.lane.b32.xlu0 %v362, 16
  %v379 = vpop.permute.xlu0 %378
  %381 = vrot.lane.b32.xlu0 %v361, 16
  %v382 = vpop.permute.xlu0 %381
  %v383 = vsel %vm84, %v382, %v379
  %v386 = vsel %vm84, %v379, %v382
  %v387 = vmul.f32 %v386, %v90
  %v388 = vmul.f32 %v383, %v91
  %v391 = vrot.slane %v387, 4
  %v392 = vrot.slane %v388, 4
  %395 = vst [vmem:[#allocation2] sm:$0xf0] %v391
  %396 = vst [vmem:[#allocation2 + $0x8] sm:$0xf0] %v392
  %397 = vrot.lane.b32.xlu0 %v362, 15
  %v398 = vpop.permute.xlu0 %397
  %400 = vrot.lane.b32.xlu0 %v361, 15
  %v401 = vpop.permute.xlu0 %400
  %v402 = vsel %vm116, %v401, %v398
  %v405 = vsel %vm116, %v398, %v401
  %v406 = vmul.f32 %v405, %v122
  %v407 = vmul.f32 %v402, %v123
  %408 = vst [vmem:[#allocation2 + $0x10] sm:$0xf] %v406
  %409 = vst [vmem:[#allocation2 + $0x18] sm:$0xf] %v407
  %410 = vrot.lane.b32.xlu0 %v362, 1
  %v411 = vpop.permute.xlu0 %410
  %413 = vrot.lane.b32.xlu0 %v361, 1
  %v414 = vpop.permute.xlu0 %413
  %v415 = vsel %vm142, %v414, %v411
  %v418 = vsel %vm142, %v411, %v414
  %v419 = vmul.f32 %v418, %v148
  %v420 = vmul.f32 %v415, %v149
  %v423 = vrot.slane %v419, 4
  %v424 = vrot.slane %v420, 4
  %427 = vst [vmem:[#allocation2 + $0x10] sm:$0xf0] %v423
  %428 = vst [vmem:[#allocation2 + $0x18] sm:$0xf0] %v424
  %v429 = vmul.f32 %v361, %v163
  %v430 = vmul.f32 %v362, %v164
  %431 = vst [vmem:[#allocation2 + $0x20] sm:$0xf] %v429
  %432 = vst [vmem:[#allocation2 + $0x28] sm:$0xf] %v430
  %433 = vrot.lane.b32.xlu0 %v361, 127
  %v434 = vpop.permute.xlu0 %433
  %435 = vrot.lane.b32.xlu0 %v362, 127
  %v436 = vpop.permute.xlu0 %435
  %v437 = vsel %vm187, %v434, %v436
  %v441 = vsel %vm187, %v436, %v434
  %v442 = vmul.f32 %v437, %v198
  %v443 = vmul.f32 %v441, %v199
  %v446 = vrot.slane %v442, 4
  %v447 = vrot.slane %v443, 4
  %450 = vst [vmem:[#allocation2 + $0x20] sm:$0xf0] %v446
  %451 = vst [vmem:[#allocation2 + $0x28] sm:$0xf0] %v447
  %452 = vrot.lane.b32.xlu0 %v361, 113
  %v453 = vpop.permute.xlu0 %452
  %454 = vrot.lane.b32.xlu0 %v362, 113
  %v455 = vpop.permute.xlu0 %454
  %v456 = vsel %vm219, %v453, %v455
  %v460 = vsel %vm219, %v455, %v453
  %v461 = vmul.f32 %v456, %v230
  %v462 = vmul.f32 %v460, %v231
  %463 = vst [vmem:[#allocation2 + $0x30] sm:$0xf] %v461
  %464 = vst [vmem:[#allocation2 + $0x38] sm:$0xf] %v462
  %465 = vrot.lane.b32.xlu0 %v361, 112
  %v466 = vpop.permute.xlu0 %465
  %467 = vrot.lane.b32.xlu0 %v362, 112
  %v468 = vpop.permute.xlu0 %467
  %v469 = vsel %vm245, %v466, %v468
  %v473 = vsel %vm245, %v468, %v466
  %v474 = vmul.f32 %v469, %v256
  %v475 = vmul.f32 %v473, %v257
  %v478 = vrot.slane %v474, 4
  %v479 = vrot.slane %v475, 4
  %482 = vst [vmem:[#allocation2 + $0x30] sm:$0xf0] %v478
  %483 = vst [vmem:[#allocation2 + $0x38] sm:$0xf0] %v479
  %484 = vrot.lane.b32.xlu0 %v361, 111
  %v485 = vpop.permute.xlu0 %484
  %486 = vrot.lane.b32.xlu0 %v362, 111
  %v487 = vpop.permute.xlu0 %486
  %v488 = vsel %vm277, %v485, %v487
  %v492 = vsel %vm277, %v487, %v485
  %v493 = vmul.f32 %v488, %v288
  %v494 = vmul.f32 %v492, %v289
  %495 = vst [vmem:[#allocation2 + $0x40] sm:$0xf] %v493
  %496 = vst [vmem:[#allocation2 + $0x48] sm:$0xf] %v494
  %v497 = vld [vmem:[#allocation2] sm:$0xff]
  %v498 = vld [vmem:[#allocation2 + $0x8] sm:$0xff]
  %v499 = vld [vmem:[#allocation2 + $0x10] sm:$0xff]
  %v500 = vld [vmem:[#allocation2 + $0x18] sm:$0xff]
  %v501 = vld [vmem:[#allocation2 + $0x20] sm:$0xff]
  %v502 = vld [vmem:[#allocation2 + $0x28] sm:$0xff]
  %v503 = vld [vmem:[#allocation2 + $0x30] sm:$0xff]
  %v504 = vld [vmem:[#allocation2 + $0x38] sm:$0xff]
  %v505 = vld [vmem:[#allocation2 + $0x40] sm:$0xf]
  %v506 = vld [vmem:[#allocation2 + $0x48] sm:$0xf]
  %508 = vset.pattern.permute.xlu0 0
  %509 = vperm.xlu0 %508, %v26
  %v510 = vpop.permute.xlu0 %509
  %v513 = vsel %vm311, %v24, 0
  %v516 = vsel %vm168, %v505, 0
  %v519 = vsel %vm168, %v506, 0
  %521 = vmatpush.msra.mxu0 0.0
  %522 = vmatpush.msra.mxu0 0.0
  %523 = vmatpush.msra.mxu0 0.0
  %524 = vmatpush.msra.mxu0 0.0
  %525 = vmatpush.msra.mxu0 0.0
  %526 = vmatpush.msra.mxu0 0.0
  %527 = vmatpush.msra.mxu0 0.0
  %528 = vmatpush.msra.mxu0 0.0
  %529 = vmatpush.msra.mxu0 0.0
  %530 = vmatpush.msra.mxu0 0.0
  %531 = vmatpush.msra.mxu0 0.0
  %532 = vmatpush.msra.mxu0 %v516
  %533 = vmatpush.msra.mxu0 %v503
  %534 = vmatpush.msra.mxu0 %v501
  %535 = vmatpush.msra.mxu0 %v499
  %536 = vmatpush.msra.mxu0 %v497
  %537 = vmatmul.f32.gmra.mxu0 %v513
  %v538 = vpop.f32.mrf.mxu0
  %v539 = vadd.f32 %v510, %v538
  %540 = vdwg.mxu0
  %541 = vmatpush.msra.mxu0 0.0
  %542 = vmatpush.msra.mxu0 0.0
  %543 = vmatpush.msra.mxu0 0.0
  %544 = vmatpush.msra.mxu0 0.0
  %545 = vmatpush.msra.mxu0 0.0
  %546 = vmatpush.msra.mxu0 0.0
  %547 = vmatpush.msra.mxu0 0.0
  %548 = vmatpush.msra.mxu0 0.0
  %549 = vmatpush.msra.mxu0 0.0
  %550 = vmatpush.msra.mxu0 0.0
  %551 = vmatpush.msra.mxu0 0.0
  %552 = vmatpush.msra.mxu0 %v519
  %553 = vmatpush.msra.mxu0 %v504
  %554 = vmatpush.msra.mxu0 %v502
  %555 = vmatpush.msra.mxu0 %v500
  %556 = vmatpush.msra.mxu0 %v498
  %557 = vmatmul.f32.gmra.mxu0 %v513
  %v558 = vpop.f32.mrf.mxu0
  %v559 = vadd.f32 %v510, %v558
  %560 = vdwg.mxu0
  %561 = vst [vmem:[#allocation1] ss:$2 sm:$0xff] %v44
  %v562 = vld.sshfl [vmem:[#allocation1] sm:$0xff pattern:$0x75316420]
  %v563 = vld.sshfl [vmem:[#allocation1 + $0x8] sm:$0xff pattern:$0x75316420]
  %v566 = vadd.f32 %v539, %v562
  %v567 = vadd.f32 %v559, %v563
  %v568 = vmax.f32 %v566, 0.0
  %v569 = vmax.f32 %v567, 0.0
  %v572 = vrot.slane %v569, 4
  %v573 = vsel %vm168, %v568, %v572
  %575 = vst [vmem:[%s6] sm:$0xff] %v573
  %s576 = scalar_lea.vmem %s0, 8
  %v577 = vld [vmem:[%s576] sm:$0xff]
  %579 = vst [vmem:[#allocation1] ss:$2 sm:$0xff] %v577
  %v580 = vld.sshfl [vmem:[#allocation1 + $0x8] sm:$0xff pattern:$0x75316420]
  %581 = vrot.lane.b32.xlu0 %v580, 17
  %v582 = vpop.permute.xlu0 %581
  %584 = vst [vmem:[#allocation1] ss:$2 sm:$0xff] %v577
  %v585 = vld.sshfl [vmem:[#allocation1] sm:$0xff pattern:$0x75316420]
  %v586 = vld.sshfl [vmem:[#allocation1 + $0x8] sm:$0xff pattern:$0x75316420]
  %587 = vrot.lane.b32.xlu0 %v585, 17
  %v588 = vpop.permute.xlu0 %587
  %589 = vrot.lane.b32.xlu0 %v586, 17
  %v590 = vpop.permute.xlu0 %589
  %v591 = vsel %vm58, %v588, %v590
  %v594 = vsel %vm58, %v582, %v588
  %v595 = vmul.f32 %v594, %v64
  %v596 = vmul.f32 %v591, %v65
  %597 = vst [vmem:[#allocation2] sm:$0xf] %v595
  %598 = vst [vmem:[#allocation2 + $0x8] sm:$0xf] %v596
  %599 = vst [vmem:[#allocation1] ss:$2 sm:$0xff] %v577
  %v600 = vld.sshfl [vmem:[#allocation1 + $0x8] sm:$0xff pattern:$0x75316420]
  %601 = vrot.lane.b32.xlu0 %v600, 16
  %v602 = vpop.permute.xlu0 %601
  %604 = vst [vmem:[#allocation1] ss:$2 sm:$0xff] %v577
  %v605 = vld.sshfl [vmem:[#allocation1] sm:$0xff pattern:$0x75316420]
  %v606 = vld.sshfl [vmem:[#allocation1 + $0x8] sm:$0xff pattern:$0x75316420]
  %607 = vrot.lane.b32.xlu0 %v605, 16
  %v608 = vpop.permute.xlu0 %607
  %609 = vrot.lane.b32.xlu0 %v606, 16
  %v610 = vpop.permute.xlu0 %609
  %v611 = vsel %vm84, %v608, %v610
  %v614 = vsel %vm84, %v602, %v608
  %v615 = vmul.f32 %v614, %v90
  %v616 = vmul.f32 %v611, %v91
  %v619 = vrot.slane %v615, 4
  %v620 = vrot.slane %v616, 4
  %623 = vst [vmem:[#allocation2] sm:$0xf0] %v619
  %624 = vst [vmem:[#allocation2 + $0x8] sm:$0xf0] %v620
  %625 = vst [vmem:[#allocation1] ss:$2 sm:$0xff] %v577
  %v626 = vld.sshfl [vmem:[#allocation1 + $0x8] sm:$0xff pattern:$0x75316420]
  %627 = vrot.lane.b32.xlu0 %v626, 15
  %v628 = vpop.permute.xlu0 %627
  %630 = vst [vmem:[#allocation1] ss:$2 sm:$0xff] %v577
  %v631 = vld.sshfl [vmem:[#allocation1] sm:$0xff pattern:$0x75316420]
  %v632 = vld.sshfl [vmem:[#allocation1 + $0x8] sm:$0xff pattern:$0x75316420]
  %633 = vrot.lane.b32.xlu0 %v631, 15
  %v634 = vpop.permute.xlu0 %633
  %635 = vrot.lane.b32.xlu0 %v632, 15
  %v636 = vpop.permute.xlu0 %635
  %v637 = vsel %vm116, %v634, %v636
  %v640 = vsel %vm116, %v628, %v634
  %v641 = vmul.f32 %v640, %v122
  %v642 = vmul.f32 %v637, %v123
  %643 = vst [vmem:[#allocation2 + $0x10] sm:$0xf] %v641
  %644 = vst [vmem:[#allocation2 + $0x18] sm:$0xf] %v642
  %645 = vst [vmem:[#allocation1] ss:$2 sm:$0xff] %v577
  %v646 = vld.sshfl [vmem:[#allocation1 + $0x8] sm:$0xff pattern:$0x75316420]
  %647 = vrot.lane.b32.xlu0 %v646, 1
  %v648 = vpop.permute.xlu0 %647
  %650 = vst [vmem:[#allocation1] ss:$2 sm:$0xff] %v577
  %v651 = vld.sshfl [vmem:[#allocation1] sm:$0xff pattern:$0x75316420]
  %v652 = vld.sshfl [vmem:[#allocation1 + $0x8] sm:$0xff pattern:$0x75316420]
  %653 = vrot.lane.b32.xlu0 %v651, 1
  %v654 = vpop.permute.xlu0 %653
  %655 = vrot.lane.b32.xlu0 %v652, 1
  %v656 = vpop.permute.xlu0 %655
  %v657 = vsel %vm142, %v654, %v656
  %v660 = vsel %vm142, %v648, %v654
  %v661 = vmul.f32 %v660, %v148
  %v662 = vmul.f32 %v657, %v149
  %v665 = vrot.slane %v661, 4
  %v666 = vrot.slane %v662, 4
  %669 = vst [vmem:[#allocation2 + $0x10] sm:$0xf0] %v665
  %670 = vst [vmem:[#allocation2 + $0x18] sm:$0xf0] %v666
  %v671 = vmul.f32 %v577, %v169
  %673 = vst [vmem:[#allocation1] ss:$2 sm:$0xff] %v671
  %v674 = vld.sshfl [vmem:[#allocation1] sm:$0xff pattern:$0x75316420]
  %v675 = vld.sshfl [vmem:[#allocation1 + $0x8] sm:$0xff pattern:$0x75316420]
  %678 = vst [vmem:[#allocation2 + $0x20] sm:$0xf] %v674
  %679 = vst [vmem:[#allocation2 + $0x28] sm:$0xf] %v675
  %680 = vst [vmem:[#allocation1] ss:$2 sm:$0xff] %v577
  %v681 = vld.sshfl [vmem:[#allocation1] sm:$0xff pattern:$0x75316420]
  %v682 = vld.sshfl [vmem:[#allocation1 + $0x8] sm:$0xff pattern:$0x75316420]
  %683 = vrot.lane.b32.xlu0 %v681, 127
  %v684 = vpop.permute.xlu0 %683
  %685 = vrot.lane.b32.xlu0 %v682, 127
  %v686 = vpop.permute.xlu0 %685
  %v687 = vsel %vm187, %v684, %v686
  %690 = vst [vmem:[#allocation1] ss:$2 sm:$0xff] %v577
  %v691 = vld.sshfl [vmem:[#allocation1] sm:$0xff pattern:$0x75316420]
  %692 = vrot.lane.b32.xlu0 %v691, 127
  %v693 = vpop.permute.xlu0 %692
  %v695 = vsel %vm187, %v686, %v693
  %v696 = vmul.f32 %v687, %v198
  %v697 = vmul.f32 %v695, %v199
  %v700 = vrot.slane %v696, 4
  %v701 = vrot.slane %v697, 4
  %704 = vst [vmem:[#allocation2 + $0x20] sm:$0xf0] %v700
  %705 = vst [vmem:[#allocation2 + $0x28] sm:$0xf0] %v701
  %706 = vst [vmem:[#allocation1] ss:$2 sm:$0xff] %v577
  %v707 = vld.sshfl [vmem:[#allocation1] sm:$0xff pattern:$0x75316420]
  %v708 = vld.sshfl [vmem:[#allocation1 + $0x8] sm:$0xff pattern:$0x75316420]
  %709 = vrot.lane.b32.xlu0 %v707, 113
  %v710 = vpop.permute.xlu0 %709
  %711 = vrot.lane.b32.xlu0 %v708, 113
  %v712 = vpop.permute.xlu0 %711
  %v713 = vsel %vm219, %v710, %v712
  %716 = vst [vmem:[#allocation1] ss:$2 sm:$0xff] %v577
  %v717 = vld.sshfl [vmem:[#allocation1] sm:$0xff pattern:$0x75316420]
  %718 = vrot.lane.b32.xlu0 %v717, 113
  %v719 = vpop.permute.xlu0 %718
  %v721 = vsel %vm219, %v712, %v719
  %v722 = vmul.f32 %v713, %v230
  %v723 = vmul.f32 %v721, %v231
  %724 = vst [vmem:[#allocation2 + $0x30] sm:$0xf] %v722
  %725 = vst [vmem:[#allocation2 + $0x38] sm:$0xf] %v723
  %726 = vst [vmem:[#allocation1] ss:$2 sm:$0xff] %v577
  %v727 = vld.sshfl [vmem:[#allocation1] sm:$0xff pattern:$0x75316420]
  %v728 = vld.sshfl [vmem:[#allocation1 + $0x8] sm:$0xff pattern:$0x75316420]
  %729 = vrot.lane.b32.xlu0 %v727, 112
  %v730 = vpop.permute.xlu0 %729
  %731 = vrot.lane.b32.xlu0 %v728, 112
  %v732 = vpop.permute.xlu0 %731
  %v733 = vsel %vm245, %v730, %v732
  %736 = vst [vmem:[#allocation1] ss:$2 sm:$0xff] %v577
  %v737 = vld.sshfl [vmem:[#allocation1] sm:$0xff pattern:$0x75316420]
  %738 = vrot.lane.b32.xlu0 %v737, 112
  %v739 = vpop.permute.xlu0 %738
  %v741 = vsel %vm245, %v732, %v739
  %v742 = vmul.f32 %v733, %v256
  %v743 = vmul.f32 %v741, %v257
  %v746 = vrot.slane %v742, 4
  %v747 = vrot.slane %v743, 4
  %750 = vst [vmem:[#allocation2 + $0x30] sm:$0xf0] %v746
  %751 = vst [vmem:[#allocation2 + $0x38] sm:$0xf0] %v747
  %752 = vst [vmem:[#allocation1] ss:$2 sm:$0xff] %v577
  %v753 = vld.sshfl [vmem:[#allocation1] sm:$0xff pattern:$0x75316420]
  %v754 = vld.sshfl [vmem:[#allocation1 + $0x8] sm:$0xff pattern:$0x75316420]
  %755 = vrot.lane.b32.xlu0 %v753, 111
  %v756 = vpop.permute.xlu0 %755
  %757 = vrot.lane.b32.xlu0 %v754, 111
  %v758 = vpop.permute.xlu0 %757
  %v759 = vsel %vm277, %v756, %v758
  %762 = vst [vmem:[#allocation1] ss:$2 sm:$0xff] %v577
  %v763 = vld.sshfl [vmem:[#allocation1] sm:$0xff pattern:$0x75316420]
  %764 = vrot.lane.b32.xlu0 %v763, 111
  %v765 = vpop.permute.xlu0 %764
  %v767 = vsel %vm277, %v758, %v765
  %v768 = vmul.f32 %v759, %v288
  %v769 = vmul.f32 %v767, %v289
  %770 = vst [vmem:[#allocation2 + $0x40] sm:$0xf] %v768
  %771 = vst [vmem:[#allocation2 + $0x48] sm:$0xf] %v769
  %v772 = vld [vmem:[#allocation2] sm:$0xff]
  %v773 = vld [vmem:[#allocation2 + $0x8] sm:$0xff]
  %v774 = vld [vmem:[#allocation2 + $0x10] sm:$0xff]
  %v775 = vld [vmem:[#allocation2 + $0x18] sm:$0xff]
  %v776 = vld [vmem:[#allocation2 + $0x20] sm:$0xff]
  %v777 = vld [vmem:[#allocation2 + $0x28] sm:$0xff]
  %v778 = vld [vmem:[#allocation2 + $0x30] sm:$0xff]
  %v779 = vld [vmem:[#allocation2 + $0x38] sm:$0xff]
  %v780 = vld [vmem:[#allocation2 + $0x40] sm:$0xf]
  %v781 = vld [vmem:[#allocation2 + $0x48] sm:$0xf]
  %v783 = vsel %vm168, %v780, 0
  %v786 = vsel %vm168, %v781, 0
  %788 = vmatpush.msra.mxu0 0.0
  %789 = vmatpush.msra.mxu0 0.0
  %790 = vmatpush.msra.mxu0 0.0
  %791 = vmatpush.msra.mxu0 0.0
  %792 = vmatpush.msra.mxu0 0.0
  %793 = vmatpush.msra.mxu0 0.0
  %794 = vmatpush.msra.mxu0 0.0
  %795 = vmatpush.msra.mxu0 0.0
  %796 = vmatpush.msra.mxu0 0.0
  %797 = vmatpush.msra.mxu0 0.0
  %798 = vmatpush.msra.mxu0 0.0
  %799 = vmatpush.msra.mxu0 %v783
  %800 = vmatpush.msra.mxu0 %v778
  %801 = vmatpush.msra.mxu0 %v776
  %802 = vmatpush.msra.mxu0 %v774
  %803 = vmatpush.msra.mxu0 %v772
  %804 = vmatmul.f32.gmra.mxu0 %v313
  %v805 = vpop.f32.mrf.mxu0
  %v806 = vadd.f32 %v309, %v805
  %807 = vdwg.mxu0
  %808 = vmatpush.msra.mxu0 0.0
  %809 = vmatpush.msra.mxu0 0.0
  %810 = vmatpush.msra.mxu0 0.0
  %811 = vmatpush.msra.mxu0 0.0
  %812 = vmatpush.msra.mxu0 0.0
  %813 = vmatpush.msra.mxu0 0.0
  %814 = vmatpush.msra.mxu0 0.0
  %815 = vmatpush.msra.mxu0 0.0
  %816 = vmatpush.msra.mxu0 0.0
  %817 = vmatpush.msra.mxu0 0.0
  %818 = vmatpush.msra.mxu0 0.0
  %819 = vmatpush.msra.mxu0 %v786
  %820 = vmatpush.msra.mxu0 %v779
  %821 = vmatpush.msra.mxu0 %v777
  %822 = vmatpush.msra.mxu0 %v775
  %823 = vmatpush.msra.mxu0 %v773
  %824 = vmatmul.f32.gmra.mxu0 %v313
  %v825 = vpop.f32.mrf.mxu0
  %v826 = vadd.f32 %v309, %v825
  %827 = vdwg.mxu0
  %v828 = vmax.f32 %v806, 0.0
  %v829 = vmax.f32 %v826, 0.0
  %831 = vrot.lane.b32.xlu0 %v829, 17
  %v832 = vpop.permute.xlu0 %831
  %835 = vrot.lane.b32.xlu0 %v828, 17
  %v836 = vpop.permute.xlu0 %835
  %v837 = vsel %vm58, %v836, %v832
  %v840 = vsel %vm58, %v832, %v836
  %v841 = vmul.f32 %v840, %v64
  %v842 = vmul.f32 %v837, %v65
  %843 = vst [vmem:[#allocation2] sm:$0xf] %v841
  %844 = vst [vmem:[#allocation2 + $0x8] sm:$0xf] %v842
  %845 = vrot.lane.b32.xlu0 %v829, 16
  %v846 = vpop.permute.xlu0 %845
  %848 = vrot.lane.b32.xlu0 %v828, 16
  %v849 = vpop.permute.xlu0 %848
  %v850 = vsel %vm84, %v849, %v846
  %v853 = vsel %vm84, %v846, %v849
  %v854 = vmul.f32 %v853, %v90
  %v855 = vmul.f32 %v850, %v91
  %v858 = vrot.slane %v854, 4
  %v859 = vrot.slane %v855, 4
  %862 = vst [vmem:[#allocation2] sm:$0xf0] %v858
  %863 = vst [vmem:[#allocation2 + $0x8] sm:$0xf0] %v859
  %864 = vrot.lane.b32.xlu0 %v829, 15
  %v865 = vpop.permute.xlu0 %864
  %867 = vrot.lane.b32.xlu0 %v828, 15
  %v868 = vpop.permute.xlu0 %867
  %v869 = vsel %vm116, %v868, %v865
  %v872 = vsel %vm116, %v865, %v868
  %v873 = vmul.f32 %v872, %v122
  %v874 = vmul.f32 %v869, %v123
  %875 = vst [vmem:[#allocation2 + $0x10] sm:$0xf] %v873
  %876 = vst [vmem:[#allocation2 + $0x18] sm:$0xf] %v874
  %877 = vrot.lane.b32.xlu0 %v829, 1
  %v878 = vpop.permute.xlu0 %877
  %880 = vrot.lane.b32.xlu0 %v828, 1
  %v881 = vpop.permute.xlu0 %880
  %v882 = vsel %vm142, %v881, %v878
  %v885 = vsel %vm142, %v878, %v881
  %v886 = vmul.f32 %v885, %v148
  %v887 = vmul.f32 %v882, %v149
  %v890 = vrot.slane %v886, 4
  %v891 = vrot.slane %v887, 4
  %894 = vst [vmem:[#allocation2 + $0x10] sm:$0xf0] %v890
  %895 = vst [vmem:[#allocation2 + $0x18] sm:$0xf0] %v891
  %v896 = vmul.f32 %v828, %v163
  %v897 = vmul.f32 %v829, %v164
  %898 = vst [vmem:[#allocation2 + $0x20] sm:$0xf] %v896
  %899 = vst [vmem:[#allocation2 + $0x28] sm:$0xf] %v897
  %900 = vrot.lane.b32.xlu0 %v828, 127
  %v901 = vpop.permute.xlu0 %900
  %902 = vrot.lane.b32.xlu0 %v829, 127
  %v903 = vpop.permute.xlu0 %902
  %v904 = vsel %vm187, %v901, %v903
  %v908 = vsel %vm187, %v903, %v901
  %v909 = vmul.f32 %v904, %v198
  %v910 = vmul.f32 %v908, %v199
  %v913 = vrot.slane %v909, 4
  %v914 = vrot.slane %v910, 4
  %917 = vst [vmem:[#allocation2 + $0x20] sm:$0xf0] %v913
  %918 = vst [vmem:[#allocation2 + $0x28] sm:$0xf0] %v914
  %919 = vrot.lane.b32.xlu0 %v828, 113
  %v920 = vpop.permute.xlu0 %919
  %921 = vrot.lane.b32.xlu0 %v829, 113
  %v922 = vpop.permute.xlu0 %921
  %v923 = vsel %vm219, %v920, %v922
  %v927 = vsel %vm219, %v922, %v920
  %v928 = vmul.f32 %v923, %v230
  %v929 = vmul.f32 %v927, %v231
  %930 = vst [vmem:[#allocation2 + $0x30] sm:$0xf] %v928
  %931 = vst [vmem:[#allocation2 + $0x38] sm:$0xf] %v929
  %932 = vrot.lane.b32.xlu0 %v828, 112
  %v933 = vpop.permute.xlu0 %932
  %934 = vrot.lane.b32.xlu0 %v829, 112
  %v935 = vpop.permute.xlu0 %934
  %v936 = vsel %vm245, %v933, %v935
  %v940 = vsel %vm245, %v935, %v933
  %v941 = vmul.f32 %v936, %v256
  %v942 = vmul.f32 %v940, %v257
  %v945 = vrot.slane %v941, 4
  %v946 = vrot.slane %v942, 4
  %949 = vst [vmem:[#allocation2 + $0x30] sm:$0xf0] %v945
  %950 = vst [vmem:[#allocation2 + $0x38] sm:$0xf0] %v946
  %951 = vrot.lane.b32.xlu0 %v828, 111
  %v952 = vpop.permute.xlu0 %951
  %953 = vrot.lane.b32.xlu0 %v829, 111
  %v954 = vpop.permute.xlu0 %953
  %v955 = vsel %vm277, %v952, %v954
  %v959 = vsel %vm277, %v954, %v952
  %v960 = vmul.f32 %v955, %v288
  %v961 = vmul.f32 %v959, %v289
  %962 = vst [vmem:[#allocation2 + $0x40] sm:$0xf] %v960
  %963 = vst [vmem:[#allocation2 + $0x48] sm:$0xf] %v961
  %v964 = vld [vmem:[#allocation2] sm:$0xff]
  %v965 = vld [vmem:[#allocation2 + $0x8] sm:$0xff]
  %v966 = vld [vmem:[#allocation2 + $0x10] sm:$0xff]
  %v967 = vld [vmem:[#allocation2 + $0x18] sm:$0xff]
  %v968 = vld [vmem:[#allocation2 + $0x20] sm:$0xff]
  %v969 = vld [vmem:[#allocation2 + $0x28] sm:$0xff]
  %v970 = vld [vmem:[#allocation2 + $0x30] sm:$0xff]
  %v971 = vld [vmem:[#allocation2 + $0x38] sm:$0xff]
  %v972 = vld [vmem:[#allocation2 + $0x40] sm:$0xf]
  %v973 = vld [vmem:[#allocation2 + $0x48] sm:$0xf]
  %v975 = vsel %vm168, %v972, 0
  %v978 = vsel %vm168, %v973, 0
  %980 = vmatpush.msra.mxu0 0.0
  %981 = vmatpush.msra.mxu0 0.0
  %982 = vmatpush.msra.mxu0 0.0
  %983 = vmatpush.msra.mxu0 0.0
  %984 = vmatpush.msra.mxu0 0.0
  %985 = vmatpush.msra.mxu0 0.0
  %986 = vmatpush.msra.mxu0 0.0
  %987 = vmatpush.msra.mxu0 0.0
  %988 = vmatpush.msra.mxu0 0.0
  %989 = vmatpush.msra.mxu0 0.0
  %990 = vmatpush.msra.mxu0 0.0
  %991 = vmatpush.msra.mxu0 %v975
  %992 = vmatpush.msra.mxu0 %v970
  %993 = vmatpush.msra.mxu0 %v968
  %994 = vmatpush.msra.mxu0 %v966
  %995 = vmatpush.msra.mxu0 %v964
  %996 = vmatmul.f32.gmra.mxu0 %v513
  %v997 = vpop.f32.mrf.mxu0
  %v998 = vadd.f32 %v510, %v997
  %999 = vdwg.mxu0
  %1000 = vmatpush.msra.mxu0 0.0
  %1001 = vmatpush.msra.mxu0 0.0
  %1002 = vmatpush.msra.mxu0 0.0
  %1003 = vmatpush.msra.mxu0 0.0
  %1004 = vmatpush.msra.mxu0 0.0
  %1005 = vmatpush.msra.mxu0 0.0
  %1006 = vmatpush.msra.mxu0 0.0
  %1007 = vmatpush.msra.mxu0 0.0
  %1008 = vmatpush.msra.mxu0 0.0
  %1009 = vmatpush.msra.mxu0 0.0
  %1010 = vmatpush.msra.mxu0 0.0
  %1011 = vmatpush.msra.mxu0 %v978
  %1012 = vmatpush.msra.mxu0 %v971
  %1013 = vmatpush.msra.mxu0 %v969
  %1014 = vmatpush.msra.mxu0 %v967
  %1015 = vmatpush.msra.mxu0 %v965
  %1016 = vmatmul.f32.gmra.mxu0 %v513
  %v1017 = vpop.f32.mrf.mxu0
  %v1018 = vadd.f32 %v510, %v1017
  %1019 = vdwg.mxu0
  %1020 = vst [vmem:[#allocation1] ss:$2 sm:$0xff] %v577
  %v1021 = vld.sshfl [vmem:[#allocation1] sm:$0xff pattern:$0x75316420]
  %v1022 = vld.sshfl [vmem:[#allocation1 + $0x8] sm:$0xff pattern:$0x75316420]
  %v1025 = vadd.f32 %v998, %v1021
  %v1026 = vadd.f32 %v1018, %v1022
  %v1027 = vmax.f32 %v1025, 0.0
  %v1028 = vmax.f32 %v1026, 0.0
  %v1031 = vrot.slane %v1028, 4
  %v1032 = vsel %vm168, %v1027, %v1031
  %s1034 = scalar_lea.vmem %s6, 8
  %1035 = vst [vmem:[%s1034] sm:$0xff] %v1032
  // Predicated region
  $region26: #{residual_block_forward.1} parent=0 // pred_check
    _
  $region27: #{residual_block_forward.1} parent=0 // pred_check_branch
    %1037 = sbr.rel (0) target = $region29
  $region28: #{residual_block_forward.1} parent=0 // pred_region
    _
  $region29: #{residual_block_forward.1} parent=0 // pred_fallthru
    _
  // Predicated region
  $region30: #{residual_block_forward.1} parent=0 // pred_check
    _
  $region31: #{residual_block_forward.1} parent=0 // pred_check_branch
    %1039 = sbr.rel (0) target = $region33
  $region32: #{residual_block_forward.1} parent=0 // pred_region
    _
  $region33: #{residual_block_forward.1} parent=0 // pred_fallthru
    _

</llo_original>
